<compile_context>
chip_gen: v6e
topology: v6e:2x2x1
jax: 0.10.0
libtpu: 0.0.40
codegen_flags: <defaults>
</compile_context>

<pallas_src>
import numpy as np
import jax
import jax.numpy as jnp
from jax import lax
from jax.experimental import pallas as pl
from jax.experimental.pallas import tpu as pltpu


# ----------------------------- LeNet geometry ------------------------------ #
K = 5                       # conv kernel size
C1 = 6                      # conv1 out channels
C2 = 16                     # conv2 out channels
NCLS = 10                   # fc out features
H0 = W0 = 16                # input spatial (Cin = 1)
H1 = W1 = H0 - K + 1        # 12 : conv1 output
HP1 = WP1 = H1 // 2         # 6  : pool1 output
H2 = W2 = HP1 - K + 1       # 2  : conv2 output


# ------------------- packed parameter blob (one DMA) ----------------------- #
def _a8(x):                 # round rows up to the sublane tile (8)
    return (x + 7) // 8 * 8


LANES = 128                                   # lane-aligned blob width
B2_BLOCK = WP1 * C1                           # 36 rows per conv2 kh-block
B2_STRIDE = _a8(B2_BLOCK)                     # 40 (8-aligned block starts)
R_B1 = 0                                      # (K*W0, W1*C1)   = (80, 72)
R_B2 = _a8(R_B1 + K * W0)                     # K blocks of (36, 32)
R_RE = _a8(R_B2 + K * B2_STRIDE)              # (W1*C1, WP1*C1) = (72, 36)
R_RO = _a8(R_RE + W1 * C1)                    # (72, 36)
R_B1B = _a8(R_RO + W1 * C1)                   # (1, 72)
R_B2B = R_B1B + 8                             # (1, 32)
R_WFC = R_B2B + 8                             # (C2, NCLS)      = (16, 10)
R_BFC = _a8(R_WFC + C2)                       # (1, 10)
BLOB_ROWS = _a8(R_BFC + 1)                    # 464


# ------------------------------ fused kernel ------------------------------- #

def _lenet_fused_kernel(x_ref, p_ref, o_ref):
    """Whole LeNet forward (conv1+relu+pool1+conv2+relu+pool2+flatten+
    L2-normalize+fc), VMEM-resident end to end, batched over images.

    x_ref : (N*16, 16)        rows = n*16 + h, cols = w   (Cin == 1)
    p_ref : (BLOB_ROWS, 128)  packed weights / pooling-selection constants
    o_ref : (N, 10)           logits
    """
    f32 = jnp.float32
    nb = x_ref.shape[0] // H0                      # static batch size
    x2 = x_ref[...]                                # (N*16, 16)

    # ---- conv1 (5x5 valid, 1->6) as K width-banded MXU matmuls -------------
    # Activations stay lane-dense: rows r = n*16 + h, cols = w*6 + cout (72
    # lanes).  Rows with h >= 12 are dead padding for images n < N-1; they are
    # simply never selected by the pooling matrices below.
    r1 = nb * H0 - (K - 1)                         # 28 for N=2
    acc1 = jnp.zeros((r1, W1 * C1), f32)
    for kh in range(K):
        b1k = p_ref[R_B1 + kh * W0:R_B1 + (kh + 1) * W0, 0:W1 * C1]   # (16, 72)
        acc1 = acc1 + jnp.dot(x2[kh:kh + r1, :], b1k,
                              preferred_element_type=f32)
    bias1 = p_ref[R_B1B:R_B1B + 1, 0:W1 * C1]      # (1, 72)
    out1 = jnp.maximum(acc1 + bias1, 0.0)          # (r1, 72)

    # ---- pool1 (2x2 stride 2) via exact 0/1 selection matmuls + max --------
    # Row pairs (h = 2i, 2i+1): selection built in-kernel from iotas (no DMA,
    # no integer div): for selection row r = n*6 + i the wanted out1 row is
    # n*16 + 2i = 2*r + 4*n.
    rr = lax.broadcasted_iota(jnp.int32, (nb * HP1, r1), 0)
    cc = lax.broadcasted_iota(jnp.int32, (nb * HP1, r1), 1)
    se_b = so_b = None
    for n in range(nb):
        in_img = (rr >= HP1 * n) & (rr < HP1 * (n + 1))
        tgt = 2 * rr + (H0 - 2 * HP1) * n
        te = in_img & (cc == tgt)
        to = in_img & (cc == tgt + 1)
        se_b = te if se_b is None else (se_b | te)
        so_b = to if so_b is None else (so_b | to)
    se = se_b.astype(f32)                          # (6N, r1)
    so = so_b.astype(f32)
    mh = jnp.maximum(jnp.dot(se, out1, preferred_element_type=f32),
                     jnp.dot(so, out1, preferred_element_type=f32))   # (6N, 72)
    # Column pairs (w = 2j, 2j+1): precomputed 0/1 matrices from the blob.
    r_e = p_ref[R_RE:R_RE + W1 * C1, 0:WP1 * C1]   # (72, 36)
    r_o = p_ref[R_RO:R_RO + W1 * C1, 0:WP1 * C1]   # (72, 36)
    p1 = jnp.maximum(jnp.dot(mh, r_e, preferred_element_type=f32),
                     jnp.dot(mh, r_o, preferred_element_type=f32))    # (6N, 36)
    # p1 rows = n*6 + i, cols = j*6 + cin   (== pool1[n, cin, i, j])

    # ---- conv2 (5x5 valid, 6->16) as K width-banded MXU matmuls ------------
    # Output rows r = n*6 + i2 (i2 in {0,1} valid, rest dead padding), cols =
    # j2*16 + cout (32 lanes) -- all images / output positions in one slab.
    r2 = nb * HP1 - (K - 1)                        # 8 for N=2
    acc2 = jnp.zeros((r2, W2 * C2), f32)
    for kh in range(K):
        row0 = R_B2 + kh * B2_STRIDE
        b2k = p_ref[row0:row0 + B2_BLOCK, 0:W2 * C2]                  # (36, 32)
        acc2 = acc2 + jnp.dot(p1[kh:kh + r2, :], b2k,
                              preferred_element_type=f32)
    bias2 = p_ref[R_B2B:R_B2B + 1, 0:W2 * C2]      # (1, 32)
    out2 = jnp.maximum(acc2 + bias2, 0.0)          # (r2, 32)

    # ---- pool2 (2x2 -> 1x1) + flatten ---------------------------------------
    qr = lax.broadcasted_iota(jnp.int32, (nb, r2), 0)
    qc = lax.broadcasted_iota(jnp.int32, (nb, r2), 1)
    qe = (qc == HP1 * qr).astype(f32)              # picks row i2 = 0 of image n
    qo = (qc == HP1 * qr + 1).astype(f32)          # picks row i2 = 1
    m2 = jnp.maximum(jnp.dot(qe, out2, preferred_element_type=f32),
                     jnp.dot(qo, out2, preferred_element_type=f32))   # (N, 32)
    feats = jnp.maximum(m2[:, 0:C2], m2[:, C2:2 * C2])                # (N, 16)
    # == torch .view(N, -1) ordering (spatial is 1x1, cols are cout).

    # ---- L2 normalize (rsqrt on the EUP) + fc -------------------------------
    # No epsilon, to match torch `x / x.norm(2, 1).unsqueeze(1)` exactly.
    inv_norm = lax.rsqrt(jnp.sum(feats * feats, axis=1, keepdims=True))
    feats = feats * inv_norm
    w_fc = p_ref[R_WFC:R_WFC + C2, 0:NCLS]         # (16, 10)
    b_fc = p_ref[R_BFC:R_BFC + 1, 0:NCLS]          # (1, 10)
    o_ref[...] = jnp.dot(feats, w_fc, preferred_element_type=f32) + b_fc


# ------------------------------- wrapper ----------------------------------- #

def lenet_forward(x, params):
    """x: (N, 1, 16, 16) float32 NCHW (Cin=1) -> (N, 10) logits."""
    n = x.shape[0]
    x2d = x.reshape(n * H0, W0)            # metadata-only reshape (Cin == 1)
    # No grid: one invocation, whole arrays resident in VMEM -> no revolving
    # double-buffer / pipeline machinery for a single step.
    # TODO(synk): for large N, add a leading "parallel" batch grid axis so the
    # two v7x TensorCores each take half the images; at N=2 one step is best.
    return pl.pallas_call(
        _lenet_fused_kernel,
        out_shape=jax.ShapeDtypeStruct((n, NCLS), jnp.float32),
        in_specs=[pl.BlockSpec(memory_space=pltpu.MemorySpace.VMEM),
                  pl.BlockSpec(memory_space=pltpu.MemorySpace.VMEM)],
        out_specs=pl.BlockSpec(memory_space=pltpu.MemorySpace.VMEM),
    )(x2d, params["blob"])


# ------------------------------- params ------------------------------------ #

def _pack_params(w1, b1, w2, b2, w_fc, b_fc):
    """One-time rearrangement of torch-layout weights into a single padded,
    (8,128)-aligned f32 blob => all parameters arrive in ONE DMA.

    w1 (C1,1,K,K), b1 (C1,), w2 (C2,C1,K,K), b2 (C2,), w_fc (C2,NCLS),
    b_fc (1,NCLS) -- torch conv / linear layouts.
    """
    blob = np.zeros((BLOB_ROWS, LANES), np.float32)

    # conv1 -> width-banded matmul weights B1[kh*16 + w_in, w*6 + cout].
    r = np.arange(K * W0)
    c = np.arange(W1 * C1)
    kh_i, w_in = r[:, None] // W0, r[:, None] % W0
    w, cout = c[None, :] // C1, c[None, :] % C1
    kw = w_in - w
    b1m = np.where((kw >= 0) & (kw < K),
                   w1[cout, 0, kh_i, np.clip(kw, 0, K - 1)], 0.0)
    blob[R_B1:R_B1 + K * W0, :W1 * C1] = b1m

    # conv2 -> width-banded matmul weights, one (36, 32) block per kh:
    #   B2_kh[j*6 + cin, j2*16 + cout] = w2[cout, cin, kh, j - j2]
    r = np.arange(B2_BLOCK)
    c = np.arange(W2 * C2)
    j, cin = r[:, None] // C1, r[:, None] % C1
    j2, cout = c[None, :] // C2, c[None, :] % C2
    kw = j - j2
    ok = (kw >= 0) & (kw < K)
    for kh in range(K):
        b2m = np.where(ok, w2[cout, cin, kh, np.clip(kw, 0, K - 1)], 0.0)
        row0 = R_B2 + kh * B2_STRIDE
        blob[row0:row0 + B2_BLOCK, :W2 * C2] = b2m

    # pool1 column-pair (w -> j) exact 0/1 selection matrices.
    rw = np.arange(W1 * C1)
    cj = np.arange(WP1 * C1)
    same_c = (rw[:, None] % C1) == (cj[None, :] % C1)
    blob[R_RE:R_RE + W1 * C1, :WP1 * C1] = (
        same_c & ((rw[:, None] // C1) == 2 * (cj[None, :] // C1)))
    blob[R_RO:R_RO + W1 * C1, :WP1 * C1] = (
        same_c & ((rw[:, None] // C1) == 2 * (cj[None, :] // C1) + 1))

    # Biases (pre-tiled to the in-kernel lane layouts) + fc.
    blob[R_B1B, :W1 * C1] = np.tile(b1, W1)
    blob[R_B2B, :W2 * C2] = np.tile(b2, W2)
    blob[R_WFC:R_WFC + C2, :NCLS] = w_fc
    blob[R_BFC, :NCLS] = b_fc
    return jnp.asarray(blob)


def init_params():
    key = jax.random.PRNGKey(0)
    k1, k2, k3, k4, k5, k6 = jax.random.split(key, 6)
    # Torch-layout weights (synthesized; see TODO at top).
    w1 = 0.1 * jax.random.normal(k1, (C1, 1, K, K), jnp.float32)
    b1 = 0.1 * jax.random.normal(k2, (C1,), jnp.float32)
    w2 = 0.1 * jax.random.normal(k3, (C2, C1, K, K), jnp.float32)
    b2 = 0.1 * jax.random.normal(k4, (C2,), jnp.float32)
    w_fc = 0.1 * jax.random.normal(k5, (C2, NCLS), jnp.float32)
    b_fc = 0.1 * jax.random.normal(k6, (1, NCLS), jnp.float32)
    blob = _pack_params(np.asarray(w1), np.asarray(b1), np.asarray(w2),
                        np.asarray(b2), np.asarray(w_fc), np.asarray(b_fc))
    return {"blob": blob}


if __name__ == "__main__":
    params = init_params()
    x = jax.random.normal(jax.random.PRNGKey(0), (2, 1, H0, W0), jnp.float32)
    fwd = jax.jit(lambda a: lenet_forward(a, params))
    out = fwd(x)
    jax.block_until_ready(out)
    assert out.shape == (2, NCLS) and out.dtype == jnp.float32
    print("KERNEL_OK")
</pallas_src>

<mosaic_0001>
module attributes {stable_mosaic.version = 11 : i64} {
  func.func @_lenet_fused_kernel(%arg0: memref<32x16xf32, #tpu.memory_space<vmem>>, %arg1: memref<464x128xf32, #tpu.memory_space<vmem>>, %arg2: memref<2x10xf32, #tpu.memory_space<vmem>>) attributes {dimension_semantics = [], scalar_prefetch = 0 : i64, scratch_operands = 0 : i64, tpu.core_type = #tpu.core_type<tc>} {
    %c0 = arith.constant 0 : index
    %c0_0 = arith.constant 0 : index
    %0 = vector.load %arg0[%c0, %c0_0] : memref<32x16xf32, #tpu.memory_space<vmem>>, vector<32x16xf32>
    %cst = arith.constant 0.000000e+00 : f32
    %1 = vector.broadcast %cst : f32 to vector<28x72xf32>
    %c0_1 = arith.constant 0 : index
    %c0_2 = arith.constant 0 : index
    %2 = vector.load %arg1[%c0_1, %c0_2] : memref<464x128xf32, #tpu.memory_space<vmem>>, vector<16x72xf32>
    %3 = vector.extract_strided_slice %0 {offsets = [0, 0], sizes = [28, 16], strides = [1, 1]} : vector<32x16xf32> to vector<28x16xf32>
    %cst_3 = arith.constant dense<0.000000e+00> : vector<28x72xf32>
    %4 = tpu.matmul %3, %2, %cst_3 {dimension_numbers = #tpu.dot_dimension_numbers<[1], [0], [0], [1], [0, 0, 1, 1], [], []>} : vector<28x16xf32>, vector<16x72xf32>, vector<28x72xf32> -> vector<28x72xf32>
    %5 = arith.addf %1, %4 : vector<28x72xf32>
    %c16 = arith.constant 16 : index
    %c0_4 = arith.constant 0 : index
    %6 = vector.load %arg1[%c16, %c0_4] : memref<464x128xf32, #tpu.memory_space<vmem>>, vector<16x72xf32>
    %7 = vector.extract_strided_slice %0 {offsets = [1, 0], sizes = [28, 16], strides = [1, 1]} : vector<32x16xf32> to vector<28x16xf32>
    %cst_5 = arith.constant dense<0.000000e+00> : vector<28x72xf32>
    %8 = tpu.matmul %7, %6, %cst_5 {dimension_numbers = #tpu.dot_dimension_numbers<[1], [0], [0], [1], [0, 0, 1, 1], [], []>} : vector<28x16xf32>, vector<16x72xf32>, vector<28x72xf32> -> vector<28x72xf32>
    %9 = arith.addf %5, %8 : vector<28x72xf32>
    %c32 = arith.constant 32 : index
    %c0_6 = arith.constant 0 : index
    %10 = vector.load %arg1[%c32, %c0_6] : memref<464x128xf32, #tpu.memory_space<vmem>>, vector<16x72xf32>
    %11 = vector.extract_strided_slice %0 {offsets = [2, 0], sizes = [28, 16], strides = [1, 1]} : vector<32x16xf32> to vector<28x16xf32>
    %cst_7 = arith.constant dense<0.000000e+00> : vector<28x72xf32>
    %12 = tpu.matmul %11, %10, %cst_7 {dimension_numbers = #tpu.dot_dimension_numbers<[1], [0], [0], [1], [0, 0, 1, 1], [], []>} : vector<28x16xf32>, vector<16x72xf32>, vector<28x72xf32> -> vector<28x72xf32>
    %13 = arith.addf %9, %12 : vector<28x72xf32>
    %c48 = arith.constant 48 : index
    %c0_8 = arith.constant 0 : index
    %14 = vector.load %arg1[%c48, %c0_8] : memref<464x128xf32, #tpu.memory_space<vmem>>, vector<16x72xf32>
    %15 = vector.extract_strided_slice %0 {offsets = [3, 0], sizes = [28, 16], strides = [1, 1]} : vector<32x16xf32> to vector<28x16xf32>
    %cst_9 = arith.constant dense<0.000000e+00> : vector<28x72xf32>
    %16 = tpu.matmul %15, %14, %cst_9 {dimension_numbers = #tpu.dot_dimension_numbers<[1], [0], [0], [1], [0, 0, 1, 1], [], []>} : vector<28x16xf32>, vector<16x72xf32>, vector<28x72xf32> -> vector<28x72xf32>
    %17 = arith.addf %13, %16 : vector<28x72xf32>
    %c64 = arith.constant 64 : index
    %c0_10 = arith.constant 0 : index
    %18 = vector.load %arg1[%c64, %c0_10] : memref<464x128xf32, #tpu.memory_space<vmem>>, vector<16x72xf32>
    %19 = vector.extract_strided_slice %0 {offsets = [4, 0], sizes = [28, 16], strides = [1, 1]} : vector<32x16xf32> to vector<28x16xf32>
    %cst_11 = arith.constant dense<0.000000e+00> : vector<28x72xf32>
    %20 = tpu.matmul %19, %18, %cst_11 {dimension_numbers = #tpu.dot_dimension_numbers<[1], [0], [0], [1], [0, 0, 1, 1], [], []>} : vector<28x16xf32>, vector<16x72xf32>, vector<28x72xf32> -> vector<28x72xf32>
    %21 = arith.addf %17, %20 : vector<28x72xf32>
    %c424 = arith.constant 424 : index
    %c0_12 = arith.constant 0 : index
    %22 = vector.load %arg1[%c424, %c0_12] : memref<464x128xf32, #tpu.memory_space<vmem>>, vector<1x72xf32>
    %23 = vector.broadcast %22 : vector<1x72xf32> to vector<28x72xf32>
    %24 = arith.addf %21, %23 : vector<28x72xf32>
    %cst_13 = arith.constant 0.000000e+00 : f32
    %25 = vector.broadcast %cst_13 : f32 to vector<28x72xf32>
    %26 = arith.maximumf %24, %25 : vector<28x72xf32>
    %27 = tpu.iota {dimensions = array<i32: 0>} : vector<12x28xi32>
    %28 = tpu.iota {dimensions = array<i32: 1>} : vector<12x28xi32>
    %c0_i32 = arith.constant 0 : i32
    %29 = vector.broadcast %c0_i32 : i32 to vector<12x28xi32>
    %30 = arith.cmpi sge, %27, %29 : vector<12x28xi32>
    %c6_i32 = arith.constant 6 : i32
    %31 = vector.broadcast %c6_i32 : i32 to vector<12x28xi32>
    %32 = arith.cmpi slt, %27, %31 : vector<12x28xi32>
    %33 = arith.andi %30, %32 : vector<12x28xi1>
    %c2_i32 = arith.constant 2 : i32
    %34 = vector.broadcast %c2_i32 : i32 to vector<12x28xi32>
    %35 = arith.muli %34, %27 : vector<12x28xi32>
    %c0_i32_14 = arith.constant 0 : i32
    %36 = vector.broadcast %c0_i32_14 : i32 to vector<12x28xi32>
    %37 = arith.addi %35, %36 : vector<12x28xi32>
    %38 = arith.cmpi eq, %28, %37 : vector<12x28xi32>
    %39 = arith.andi %33, %38 : vector<12x28xi1>
    %c1_i32 = arith.constant 1 : i32
    %40 = vector.broadcast %c1_i32 : i32 to vector<12x28xi32>
    %41 = arith.addi %37, %40 : vector<12x28xi32>
    %42 = arith.cmpi eq, %28, %41 : vector<12x28xi32>
    %43 = arith.andi %33, %42 : vector<12x28xi1>
    %c6_i32_15 = arith.constant 6 : i32
    %44 = vector.broadcast %c6_i32_15 : i32 to vector<12x28xi32>
    %45 = arith.cmpi sge, %27, %44 : vector<12x28xi32>
    %c12_i32 = arith.constant 12 : i32
    %46 = vector.broadcast %c12_i32 : i32 to vector<12x28xi32>
    %47 = arith.cmpi slt, %27, %46 : vector<12x28xi32>
    %48 = arith.andi %45, %47 : vector<12x28xi1>
    %c2_i32_16 = arith.constant 2 : i32
    %49 = vector.broadcast %c2_i32_16 : i32 to vector<12x28xi32>
    %50 = arith.muli %49, %27 : vector<12x28xi32>
    %c4_i32 = arith.constant 4 : i32
    %51 = vector.broadcast %c4_i32 : i32 to vector<12x28xi32>
    %52 = arith.addi %50, %51 : vector<12x28xi32>
    %53 = arith.cmpi eq, %28, %52 : vector<12x28xi32>
    %54 = arith.andi %48, %53 : vector<12x28xi1>
    %c1_i32_17 = arith.constant 1 : i32
    %55 = vector.broadcast %c1_i32_17 : i32 to vector<12x28xi32>
    %56 = arith.addi %52, %55 : vector<12x28xi32>
    %57 = arith.cmpi eq, %28, %56 : vector<12x28xi32>
    %58 = arith.andi %48, %57 : vector<12x28xi1>
    %59 = arith.ori %39, %54 : vector<12x28xi1>
    %60 = arith.ori %43, %58 : vector<12x28xi1>
    %61 = arith.extui %59 : vector<12x28xi1> to vector<12x28xi32>
    %62 = arith.sitofp %61 : vector<12x28xi32> to vector<12x28xf32>
    %63 = arith.extui %60 : vector<12x28xi1> to vector<12x28xi32>
    %64 = arith.sitofp %63 : vector<12x28xi32> to vector<12x28xf32>
    %cst_18 = arith.constant dense<0.000000e+00> : vector<12x72xf32>
    %65 = tpu.matmul %62, %26, %cst_18 {dimension_numbers = #tpu.dot_dimension_numbers<[1], [0], [0], [1], [0, 0, 1, 1], [], []>} : vector<12x28xf32>, vector<28x72xf32>, vector<12x72xf32> -> vector<12x72xf32>
    %cst_19 = arith.constant dense<0.000000e+00> : vector<12x72xf32>
    %66 = tpu.matmul %64, %26, %cst_19 {dimension_numbers = #tpu.dot_dimension_numbers<[1], [0], [0], [1], [0, 0, 1, 1], [], []>} : vector<12x28xf32>, vector<28x72xf32>, vector<12x72xf32> -> vector<12x72xf32>
    %67 = arith.maximumf %65, %66 : vector<12x72xf32>
    %c280 = arith.constant 280 : index
    %c0_20 = arith.constant 0 : index
    %68 = vector.load %arg1[%c280, %c0_20] : memref<464x128xf32, #tpu.memory_space<vmem>>, vector<72x36xf32>
    %c352 = arith.constant 352 : index
    %c0_21 = arith.constant 0 : index
    %69 = vector.load %arg1[%c352, %c0_21] : memref<464x128xf32, #tpu.memory_space<vmem>>, vector<72x36xf32>
    %cst_22 = arith.constant dense<0.000000e+00> : vector<12x36xf32>
    %70 = tpu.matmul %67, %68, %cst_22 {dimension_numbers = #tpu.dot_dimension_numbers<[1], [0], [0], [1], [0, 0, 1, 1], [], []>} : vector<12x72xf32>, vector<72x36xf32>, vector<12x36xf32> -> vector<12x36xf32>
    %cst_23 = arith.constant dense<0.000000e+00> : vector<12x36xf32>
    %71 = tpu.matmul %67, %69, %cst_23 {dimension_numbers = #tpu.dot_dimension_numbers<[1], [0], [0], [1], [0, 0, 1, 1], [], []>} : vector<12x72xf32>, vector<72x36xf32>, vector<12x36xf32> -> vector<12x36xf32>
    %72 = arith.maximumf %70, %71 : vector<12x36xf32>
    %cst_24 = arith.constant 0.000000e+00 : f32
    %73 = vector.broadcast %cst_24 : f32 to vector<8x32xf32>
    %c80 = arith.constant 80 : index
    %c0_25 = arith.constant 0 : index
    %74 = vector.load %arg1[%c80, %c0_25] : memref<464x128xf32, #tpu.memory_space<vmem>>, vector<36x32xf32>
    %75 = vector.extract_strided_slice %72 {offsets = [0, 0], sizes = [8, 36], strides = [1, 1]} : vector<12x36xf32> to vector<8x36xf32>
    %cst_26 = arith.constant dense<0.000000e+00> : vector<8x32xf32>
    %76 = tpu.matmul %75, %74, %cst_26 {dimension_numbers = #tpu.dot_dimension_numbers<[1], [0], [0], [1], [0, 0, 1, 1], [], []>} : vector<8x36xf32>, vector<36x32xf32>, vector<8x32xf32> -> vector<8x32xf32>
    %77 = arith.addf %73, %76 : vector<8x32xf32>
    %c120 = arith.constant 120 : index
    %c0_27 = arith.constant 0 : index
    %78 = vector.load %arg1[%c120, %c0_27] : memref<464x128xf32, #tpu.memory_space<vmem>>, vector<36x32xf32>
    %79 = vector.extract_strided_slice %72 {offsets = [1, 0], sizes = [8, 36], strides = [1, 1]} : vector<12x36xf32> to vector<8x36xf32>
    %cst_28 = arith.constant dense<0.000000e+00> : vector<8x32xf32>
    %80 = tpu.matmul %79, %78, %cst_28 {dimension_numbers = #tpu.dot_dimension_numbers<[1], [0], [0], [1], [0, 0, 1, 1], [], []>} : vector<8x36xf32>, vector<36x32xf32>, vector<8x32xf32> -> vector<8x32xf32>
    %81 = arith.addf %77, %80 : vector<8x32xf32>
    %c160 = arith.constant 160 : index
    %c0_29 = arith.constant 0 : index
    %82 = vector.load %arg1[%c160, %c0_29] : memref<464x128xf32, #tpu.memory_space<vmem>>, vector<36x32xf32>
    %83 = vector.extract_strided_slice %72 {offsets = [2, 0], sizes = [8, 36], strides = [1, 1]} : vector<12x36xf32> to vector<8x36xf32>
    %cst_30 = arith.constant dense<0.000000e+00> : vector<8x32xf32>
    %84 = tpu.matmul %83, %82, %cst_30 {dimension_numbers = #tpu.dot_dimension_numbers<[1], [0], [0], [1], [0, 0, 1, 1], [], []>} : vector<8x36xf32>, vector<36x32xf32>, vector<8x32xf32> -> vector<8x32xf32>
    %85 = arith.addf %81, %84 : vector<8x32xf32>
    %c200 = arith.constant 200 : index
    %c0_31 = arith.constant 0 : index
    %86 = vector.load %arg1[%c200, %c0_31] : memref<464x128xf32, #tpu.memory_space<vmem>>, vector<36x32xf32>
    %87 = vector.extract_strided_slice %72 {offsets = [3, 0], sizes = [8, 36], strides = [1, 1]} : vector<12x36xf32> to vector<8x36xf32>
    %cst_32 = arith.constant dense<0.000000e+00> : vector<8x32xf32>
    %88 = tpu.matmul %87, %86, %cst_32 {dimension_numbers = #tpu.dot_dimension_numbers<[1], [0], [0], [1], [0, 0, 1, 1], [], []>} : vector<8x36xf32>, vector<36x32xf32>, vector<8x32xf32> -> vector<8x32xf32>
    %89 = arith.addf %85, %88 : vector<8x32xf32>
    %c240 = arith.constant 240 : index
    %c0_33 = arith.constant 0 : index
    %90 = vector.load %arg1[%c240, %c0_33] : memref<464x128xf32, #tpu.memory_space<vmem>>, vector<36x32xf32>
    %91 = vector.extract_strided_slice %72 {offsets = [4, 0], sizes = [8, 36], strides = [1, 1]} : vector<12x36xf32> to vector<8x36xf32>
    %cst_34 = arith.constant dense<0.000000e+00> : vector<8x32xf32>
    %92 = tpu.matmul %91, %90, %cst_34 {dimension_numbers = #tpu.dot_dimension_numbers<[1], [0], [0], [1], [0, 0, 1, 1], [], []>} : vector<8x36xf32>, vector<36x32xf32>, vector<8x32xf32> -> vector<8x32xf32>
    %93 = arith.addf %89, %92 : vector<8x32xf32>
    %c432 = arith.constant 432 : index
    %c0_35 = arith.constant 0 : index
    %94 = vector.load %arg1[%c432, %c0_35] : memref<464x128xf32, #tpu.memory_space<vmem>>, vector<1x32xf32>
    %95 = vector.broadcast %94 : vector<1x32xf32> to vector<8x32xf32>
    %96 = arith.addf %93, %95 : vector<8x32xf32>
    %cst_36 = arith.constant 0.000000e+00 : f32
    %97 = vector.broadcast %cst_36 : f32 to vector<8x32xf32>
    %98 = arith.maximumf %96, %97 : vector<8x32xf32>
    %99 = tpu.iota {dimensions = array<i32: 0>} : vector<2x8xi32>
    %100 = tpu.iota {dimensions = array<i32: 1>} : vector<2x8xi32>
    %c6_i32_37 = arith.constant 6 : i32
    %101 = vector.broadcast %c6_i32_37 : i32 to vector<2x8xi32>
    %102 = arith.muli %101, %99 : vector<2x8xi32>
    %103 = arith.cmpi eq, %100, %102 : vector<2x8xi32>
    %104 = arith.extui %103 : vector<2x8xi1> to vector<2x8xi32>
    %105 = arith.sitofp %104 : vector<2x8xi32> to vector<2x8xf32>
    %c6_i32_38 = arith.constant 6 : i32
    %106 = vector.broadcast %c6_i32_38 : i32 to vector<2x8xi32>
    %107 = arith.muli %106, %99 : vector<2x8xi32>
    %c1_i32_39 = arith.constant 1 : i32
    %108 = vector.broadcast %c1_i32_39 : i32 to vector<2x8xi32>
    %109 = arith.addi %107, %108 : vector<2x8xi32>
    %110 = arith.cmpi eq, %100, %109 : vector<2x8xi32>
    %111 = arith.extui %110 : vector<2x8xi1> to vector<2x8xi32>
    %112 = arith.sitofp %111 : vector<2x8xi32> to vector<2x8xf32>
    %cst_40 = arith.constant dense<0.000000e+00> : vector<2x32xf32>
    %113 = tpu.matmul %105, %98, %cst_40 {dimension_numbers = #tpu.dot_dimension_numbers<[1], [0], [0], [1], [0, 0, 1, 1], [], []>} : vector<2x8xf32>, vector<8x32xf32>, vector<2x32xf32> -> vector<2x32xf32>
    %cst_41 = arith.constant dense<0.000000e+00> : vector<2x32xf32>
    %114 = tpu.matmul %112, %98, %cst_41 {dimension_numbers = #tpu.dot_dimension_numbers<[1], [0], [0], [1], [0, 0, 1, 1], [], []>} : vector<2x8xf32>, vector<8x32xf32>, vector<2x32xf32> -> vector<2x32xf32>
    %115 = arith.maximumf %113, %114 : vector<2x32xf32>
    %116 = vector.extract_strided_slice %115 {offsets = [0, 0], sizes = [2, 16], strides = [1, 1]} : vector<2x32xf32> to vector<2x16xf32>
    %117 = vector.extract_strided_slice %115 {offsets = [0, 16], sizes = [2, 16], strides = [1, 1]} : vector<2x32xf32> to vector<2x16xf32>
    %118 = arith.maximumf %116, %117 : vector<2x16xf32>
    %119 = arith.mulf %118, %118 : vector<2x16xf32>
    %cst_42 = arith.constant dense<0.000000e+00> : vector<2xf32>
    %120 = vector.multi_reduction <add>, %119, %cst_42 [1] : vector<2x16xf32> to vector<2xf32>
    %121 = vector.shape_cast %120 : vector<2xf32> to vector<2x1xf32>
    %122 = math.rsqrt %121 : vector<2x1xf32>
    %123 = vector.broadcast %122 : vector<2x1xf32> to vector<2x16xf32>
    %124 = arith.mulf %118, %123 : vector<2x16xf32>
    %c440 = arith.constant 440 : index
    %c0_43 = arith.constant 0 : index
    %125 = vector.load %arg1[%c440, %c0_43] : memref<464x128xf32, #tpu.memory_space<vmem>>, vector<16x10xf32>
    %c456 = arith.constant 456 : index
    %c0_44 = arith.constant 0 : index
    %126 = vector.load %arg1[%c456, %c0_44] : memref<464x128xf32, #tpu.memory_space<vmem>>, vector<1x10xf32>
    %cst_45 = arith.constant dense<0.000000e+00> : vector<2x10xf32>
    %127 = tpu.matmul %124, %125, %cst_45 {dimension_numbers = #tpu.dot_dimension_numbers<[1], [0], [0], [1], [0, 0, 1, 1], [], []>} : vector<2x16xf32>, vector<16x10xf32>, vector<2x10xf32> -> vector<2x10xf32>
    %128 = vector.broadcast %126 : vector<1x10xf32> to vector<2x10xf32>
    %129 = arith.addf %127, %128 : vector<2x10xf32>
    %c0_46 = arith.constant 0 : index
    %c0_47 = arith.constant 0 : index
    %130 = vector.load %arg2[%c0_46, %c0_47] : memref<2x10xf32, #tpu.memory_space<vmem>>, vector<2x10xf32>
    tpu.vector_store %arg2[%c0_46, %c0_47], %129 {strides = array<i32>} : memref<2x10xf32, #tpu.memory_space<vmem>>, vector<2x10xf32>,
    return
  }
}

</mosaic_0001>

<llo_original>
// kernel: _lambda_.1
$region0: #{_lambda_.1}
  #allocation0 [shape = 'u32[]', space=smem, size = 0x4, offset = 0x4, fixed_abs, tag = 'smem constant byte address 0x4 - core index']
  #allocation1 [shape = 'u32[144,128]{1,0:T(1,128)}', space=vmem, size = 0x12000, scoped, tag = 'internal scratch']
  %s0 = inlined_call_operand.hbm [shape: f32[32,16], index: 0, kind: input, shape index: {}]
  %s1 = inlined_call_operand.hbm [shape: f32[464,128], index: 1, kind: input, shape index: {}]
  %s2 = inlined_call_operand.hbm [shape: f32[2,10], index: 2, kind: output, shape index: {}]
  %s3 = sld [smem:[#allocation0]]
  $region26: #{_lambda_.1} parent=0
    _
  %s5 = ssub.s32 1, %s3
  %s6 = scalar_select 0, %s5, %s3
  $region1: #{_lambda_.1} parent=0
    #allocation2 [shape = 'u8[16384]{0}', space=vmem, size = 0x4000, scoped, tag = 'input window, operand 0, single buffered']
    #allocation3 [shape = 's32[1]{0}', space=sflag, size = 0x4, scoped, tag = 'scoped memory for _lambda_.1']
    #allocation4 [shape = 's32[1]{0}', space=sflag, size = 0x4, scoped, tag = 'scoped memory for _lambda_.1']
    #allocation5 [shape = 'u8[237568]{0}', space=vmem, size = 0x3a000, scoped, tag = 'input window, operand 1, single buffered']
    #allocation6 [shape = 's32[1]{0}', space=sflag, size = 0x4, scoped, tag = 'scoped memory for _lambda_.1']
    #allocation7 [shape = 'u8[1024]{0}', space=vmem, size = 0x400, scoped, tag = 'output window, operand 0, single buffered']
    %7 = vsyncpa [#allocation3], 0
    %8 = vsyncpa [#allocation6], 0
    %9 = vsyncpa [#allocation4], 0
    // Predicated region
    $region2: #{_lambda_.1} parent=1 // pred_check
      _
    $region3: #{_lambda_.1} parent=1 // pred_check_branch
      %11 = sbr.rel (0) target = $region5
    $region4: #{_lambda_.1} parent=1 // pred_region
      %s13 = ssub.s32 512, 512
      %14 = vsyncadd [#allocation3], %s13
      %s15 = sshll.u32 [#allocation2], 4
      %s16 = int_to_ptr.vmem [resolvable:$true] %s15
      %21 = dma.hbm_to_vmem [thread:$0]  %s0, 512, %s16, [#allocation3], 128, 128, 8
    $region5: #{_lambda_.1} parent=1 // pred_fallthru
      _
    // Predicated region
    $region6: #{_lambda_.1} parent=1 // pred_check
      _
    $region7: #{_lambda_.1} parent=1 // pred_check_branch
      %23 = sbr.rel (0) target = $region9
    $region8: #{_lambda_.1} parent=1 // pred_region
      %s25 = ssub.s32 7424, 7424
      %26 = vsyncadd [#allocation6], %s25
      %s27 = sshll.u32 [#allocation5], 4
      %s28 = int_to_ptr.vmem [resolvable:$true] %s27
      %33 = dma.hbm_to_vmem [thread:$0]  %s1, 7424, %s28, [#allocation6], 128, 128, 8
    $region9: #{_lambda_.1} parent=1 // pred_fallthru
      _
    // Predicated region
    $region10: #{_lambda_.1} parent=1 // pred_check
      _
    $region11: #{_lambda_.1} parent=1 // pred_check_branch
      %35 = sbr.rel (0) target = $region13
    $region12: #{_lambda_.1} parent=1 // pred_region
      %36 = dma.done [#allocation3], 512
    $region13: #{_lambda_.1} parent=1 // pred_fallthru
      _
    // Predicated region
    $region14: #{_lambda_.1} parent=1 // pred_check
      _
    $region15: #{_lambda_.1} parent=1 // pred_check_branch
      %38 = sbr.rel (0) target = $region17
    $region16: #{_lambda_.1} parent=1 // pred_region
      %39 = dma.done [#allocation6], 7424
    $region17: #{_lambda_.1} parent=1 // pred_fallthru
      _
    %v40 = vld [vmem:[#allocation2] sm:$0xff]
    %v41 = vld [vmem:[#allocation2 + $0x8] sm:$0xff]
    %v42 = vld [vmem:[#allocation2 + $0x10] sm:$0xff]
    %v43 = vld [vmem:[#allocation2 + $0x18] sm:$0xff]
    %v44 = vld [vmem:[#allocation5] sm:$0xff]
    %v45 = vld [vmem:[#allocation5 + $0x8] sm:$0xff]
    %v46 = vld [vmem:[#allocation5 + $0x10] sm:$0xff]
    %v47 = vld [vmem:[#allocation5 + $0x18] sm:$0xff]
    %vm52 = vcmask 1046528
    %v53 = vrot.slane %v40, 1
    %v54 = vrot.slane %v41, 1
    %v55 = vsel %vm52, %v53, %v54
    %v56 = vrot.slane %v42, 1
    %v57 = vsel %vm52, %v54, %v56
    %v58 = vrot.slane %v43, 1
    %v59 = vsel %vm52, %v56, %v58
    %vm60 = vcmask 130048
    %v61 = vsel %vm60, %v55, 0
    %v63 = vsel %vm60, %v57, 0
    %v65 = vsel %vm60, %v59, 0
    %v67 = vsel %vm60, %v58, 0
    %69 = vmatprep.subr.mxu0 0.0
    %70 = vmatpush1.msra.mxu0 0.0
    %71 = vmatprep.subr.mxu0 0.0
    %72 = vmatpush1.msra.mxu0 0.0
    %73 = vmatprep.subr.mxu0 0.0
    %74 = vmatpush1.msra.mxu0 0.0
    %75 = vmatprep.subr.mxu0 0.0
    %76 = vmatpush1.msra.mxu0 0.0
    %77 = vmatprep.subr.mxu0 0.0
    %78 = vmatpush1.msra.mxu0 0.0
    %79 = vmatprep.subr.mxu0 0.0
    %80 = vmatpush1.msra.mxu0 0.0
    %81 = vmatprep.subr.mxu0 0.0
    %82 = vmatpush1.msra.mxu0 0.0
    %83 = vmatprep.subr.mxu0 0.0
    %84 = vmatpush1.msra.mxu0 0.0
    %85 = vmatprep.subr.mxu0 0.0
    %86 = vmatpush1.msra.mxu0 0.0
    %87 = vmatprep.subr.mxu0 0.0
    %88 = vmatpush1.msra.mxu0 0.0
    %89 = vmatprep.subr.mxu0 0.0
    %90 = vmatpush1.msra.mxu0 0.0
    %91 = vmatprep.subr.mxu0 0.0
    %92 = vmatpush1.msra.mxu0 0.0
    %93 = vmatprep.subr.mxu0 0.0
    %94 = vmatpush1.msra.mxu0 0.0
    %95 = vmatprep.subr.mxu0 0.0
    %96 = vmatpush1.msra.mxu0 0.0
    %97 = vmatprep.subr.mxu0 0.0
    %98 = vmatpush1.msra.mxu0 %v47
    %99 = vmatprep.subr.mxu0 0.0
    %100 = vmatpush1.msra.mxu0 %v46
    %101 = vmatprep.subr.mxu0 0.0
    %102 = vmatpush2.msra.mxu0 0.0
    %103 = vmatprep.subr.mxu0 0.0
    %104 = vmatpush2.msra.mxu0 0.0
    %105 = vmatprep.subr.mxu0 0.0
    %106 = vmatpush2.msra.mxu0 0.0
    %107 = vmatprep.subr.mxu0 0.0
    %108 = vmatpush2.msra.mxu0 0.0
    %109 = vmatprep.subr.mxu0 0.0
    %110 = vmatpush2.msra.mxu0 0.0
    %111 = vmatprep.subr.mxu0 0.0
    %112 = vmatpush2.msra.mxu0 0.0
    %113 = vmatprep.subr.mxu0 0.0
    %114 = vmatpush2.msra.mxu0 0.0
    %115 = vmatprep.subr.mxu0 0.0
    %116 = vmatpush2.msra.mxu0 0.0
    %117 = vmatprep.subr.mxu0 0.0
    %118 = vmatpush2.msra.mxu0 0.0
    %119 = vmatprep.subr.mxu0 0.0
    %120 = vmatpush2.msra.mxu0 0.0
    %121 = vmatprep.subr.mxu0 0.0
    %122 = vmatpush2.msra.mxu0 0.0
    %123 = vmatprep.subr.mxu0 0.0
    %124 = vmatpush2.msra.mxu0 0.0
    %125 = vmatprep.subr.mxu0 0.0
    %126 = vmatpush2.msra.mxu0 0.0
    %127 = vmatprep.subr.mxu0 0.0
    %128 = vmatpush2.msra.mxu0 0.0
    %129 = vmatprep.subr.mxu0 0.0
    %130 = vmatpush2.msra.mxu0 0.0
    %131 = vmatprep.subr.mxu0 0.0
    %132 = vmatpush2.msra.mxu0 0.0
    %133 = vmatprep.mubr.f32.mxu0 0.0
    %134 = vmatmul.mubr.f32.gmra.mxu0 %v61
    %v135 = vpop.f32.mrf.mxu0
    %v136 = vadd.f32 0.0, %v135
    %v137 = vpop.f32.mrf.mxu0
    %138 = vmatprep.mubr.f32.mxu0 0.0
    %139 = vmatmul.mubr.f32.gmra.mxu0 %v63
    %v140 = vpop.f32.mrf.mxu0
    %v141 = vadd.f32 0.0, %v140
    %v142 = vpop.f32.mrf.mxu0
    %143 = vmatprep.mubr.f32.mxu0 0.0
    %144 = vmatmul.mubr.f32.gmra.mxu0 %v65
    %v145 = vpop.f32.mrf.mxu0
    %v146 = vadd.f32 0.0, %v145
    %v147 = vpop.f32.mrf.mxu0
    %148 = vmatprep.mubr.f32.mxu0 0.0
    %149 = vmatmul.mubr.f32.gmra.mxu0 %v67
    %v150 = vpop.f32.mrf.mxu0
    %v151 = vadd.f32 0.0, %v150
    %v152 = vpop.f32.mrf.mxu0
    %153 = vdwg.mxu0
    %v154 = vsel %vm60, %v40, 0
    %v156 = vsel %vm60, %v41, 0
    %v158 = vsel %vm60, %v42, 0
    %v160 = vsel %vm60, %v43, 0
    %162 = vmatprep.subr.mxu0 0.0
    %163 = vmatpush1.msra.mxu0 0.0
    %164 = vmatprep.subr.mxu0 0.0
    %165 = vmatpush1.msra.mxu0 0.0
    %166 = vmatprep.subr.mxu0 0.0
    %167 = vmatpush1.msra.mxu0 0.0
    %168 = vmatprep.subr.mxu0 0.0
    %169 = vmatpush1.msra.mxu0 0.0
    %170 = vmatprep.subr.mxu0 0.0
    %171 = vmatpush1.msra.mxu0 0.0
    %172 = vmatprep.subr.mxu0 0.0
    %173 = vmatpush1.msra.mxu0 0.0
    %174 = vmatprep.subr.mxu0 0.0
    %175 = vmatpush1.msra.mxu0 0.0
    %176 = vmatprep.subr.mxu0 0.0
    %177 = vmatpush1.msra.mxu0 0.0
    %178 = vmatprep.subr.mxu0 0.0
    %179 = vmatpush1.msra.mxu0 0.0
    %180 = vmatprep.subr.mxu0 0.0
    %181 = vmatpush1.msra.mxu0 0.0
    %182 = vmatprep.subr.mxu0 0.0
    %183 = vmatpush1.msra.mxu0 0.0
    %184 = vmatprep.subr.mxu0 0.0
    %185 = vmatpush1.msra.mxu0 0.0
    %186 = vmatprep.subr.mxu0 0.0
    %187 = vmatpush1.msra.mxu0 0.0
    %188 = vmatprep.subr.mxu0 0.0
    %189 = vmatpush1.msra.mxu0 0.0
    %190 = vmatprep.subr.mxu0 0.0
    %191 = vmatpush1.msra.mxu0 %v45
    %192 = vmatprep.subr.mxu0 0.0
    %193 = vmatpush1.msra.mxu0 %v44
    %194 = vmatprep.subr.mxu0 0.0
    %195 = vmatpush2.msra.mxu0 0.0
    %196 = vmatprep.subr.mxu0 0.0
    %197 = vmatpush2.msra.mxu0 0.0
    %198 = vmatprep.subr.mxu0 0.0
    %199 = vmatpush2.msra.mxu0 0.0
    %200 = vmatprep.subr.mxu0 0.0
    %201 = vmatpush2.msra.mxu0 0.0
    %202 = vmatprep.subr.mxu0 0.0
    %203 = vmatpush2.msra.mxu0 0.0
    %204 = vmatprep.subr.mxu0 0.0
    %205 = vmatpush2.msra.mxu0 0.0
    %206 = vmatprep.subr.mxu0 0.0
    %207 = vmatpush2.msra.mxu0 0.0
    %208 = vmatprep.subr.mxu0 0.0
    %209 = vmatpush2.msra.mxu0 0.0
    %210 = vmatprep.subr.mxu0 0.0
    %211 = vmatpush2.msra.mxu0 0.0
    %212 = vmatprep.subr.mxu0 0.0
    %213 = vmatpush2.msra.mxu0 0.0
    %214 = vmatprep.subr.mxu0 0.0
    %215 = vmatpush2.msra.mxu0 0.0
    %216 = vmatprep.subr.mxu0 0.0
    %217 = vmatpush2.msra.mxu0 0.0
    %218 = vmatprep.subr.mxu0 0.0
    %219 = vmatpush2.msra.mxu0 0.0
    %220 = vmatprep.subr.mxu0 0.0
    %221 = vmatpush2.msra.mxu0 0.0
    %222 = vmatprep.subr.mxu0 0.0
    %223 = vmatpush2.msra.mxu0 0.0
    %224 = vmatprep.subr.mxu0 0.0
    %225 = vmatpush2.msra.mxu0 0.0
    %226 = vmatprep.mubr.f32.mxu0 0.0
    %227 = vmatmul.mubr.f32.gmra.mxu0 %v154
    %v228 = vpop.f32.mrf.mxu0
    %v229 = vadd.f32 %v136, %v228
    %v230 = vpop.f32.mrf.mxu0
    %231 = vmatprep.mubr.f32.mxu0 0.0
    %232 = vmatmul.mubr.f32.gmra.mxu0 %v156
    %v233 = vpop.f32.mrf.mxu0
    %v234 = vadd.f32 %v141, %v233
    %v235 = vpop.f32.mrf.mxu0
    %236 = vmatprep.mubr.f32.mxu0 0.0
    %237 = vmatmul.mubr.f32.gmra.mxu0 %v158
    %v238 = vpop.f32.mrf.mxu0
    %v239 = vadd.f32 %v146, %v238
    %v240 = vpop.f32.mrf.mxu0
    %241 = vmatprep.mubr.f32.mxu0 0.0
    %242 = vmatmul.mubr.f32.gmra.mxu0 %v160
    %v243 = vpop.f32.mrf.mxu0
    %v244 = vadd.f32 %v151, %v243
    %v245 = vpop.f32.mrf.mxu0
    %246 = vdwg.mxu0
    %v247 = vld [vmem:[#allocation5 + $0x20] sm:$0xff]
    %v248 = vld [vmem:[#allocation5 + $0x28] sm:$0xff]
    %vm249 = vcmask 1045504
    %v250 = vrot.slane %v40, 2
    %v251 = vrot.slane %v41, 2
    %v252 = vsel %vm249, %v250, %v251
    %v253 = vrot.slane %v42, 2
    %v254 = vsel %vm249, %v251, %v253
    %v255 = vrot.slane %v43, 2
    %v256 = vsel %vm249, %v253, %v255
    %v257 = vsel %vm60, %v252, 0
    %v259 = vsel %vm60, %v254, 0
    %v261 = vsel %vm60, %v256, 0
    %v263 = vsel %vm60, %v255, 0
    %265 = vmatprep.subr.mxu0 0.0
    %266 = vmatpush1.msra.mxu0 0.0
    %267 = vmatprep.subr.mxu0 0.0
    %268 = vmatpush1.msra.mxu0 0.0
    %269 = vmatprep.subr.mxu0 0.0
    %270 = vmatpush1.msra.mxu0 0.0
    %271 = vmatprep.subr.mxu0 0.0
    %272 = vmatpush1.msra.mxu0 0.0
    %273 = vmatprep.subr.mxu0 0.0
    %274 = vmatpush1.msra.mxu0 0.0
    %275 = vmatprep.subr.mxu0 0.0
    %276 = vmatpush1.msra.mxu0 0.0
    %277 = vmatprep.subr.mxu0 0.0
    %278 = vmatpush1.msra.mxu0 0.0
    %279 = vmatprep.subr.mxu0 0.0
    %280 = vmatpush1.msra.mxu0 0.0
    %281 = vmatprep.subr.mxu0 0.0
    %282 = vmatpush1.msra.mxu0 0.0
    %283 = vmatprep.subr.mxu0 0.0
    %284 = vmatpush1.msra.mxu0 0.0
    %285 = vmatprep.subr.mxu0 0.0
    %286 = vmatpush1.msra.mxu0 0.0
    %287 = vmatprep.subr.mxu0 0.0
    %288 = vmatpush1.msra.mxu0 0.0
    %289 = vmatprep.subr.mxu0 0.0
    %290 = vmatpush1.msra.mxu0 0.0
    %291 = vmatprep.subr.mxu0 0.0
    %292 = vmatpush1.msra.mxu0 0.0
    %293 = vmatprep.subr.mxu0 0.0
    %294 = vmatpush1.msra.mxu0 %v248
    %295 = vmatprep.subr.mxu0 0.0
    %296 = vmatpush1.msra.mxu0 %v247
    %297 = vmatprep.subr.mxu0 0.0
    %298 = vmatpush2.msra.mxu0 0.0
    %299 = vmatprep.subr.mxu0 0.0
    %300 = vmatpush2.msra.mxu0 0.0
    %301 = vmatprep.subr.mxu0 0.0
    %302 = vmatpush2.msra.mxu0 0.0
    %303 = vmatprep.subr.mxu0 0.0
    %304 = vmatpush2.msra.mxu0 0.0
    %305 = vmatprep.subr.mxu0 0.0
    %306 = vmatpush2.msra.mxu0 0.0
    %307 = vmatprep.subr.mxu0 0.0
    %308 = vmatpush2.msra.mxu0 0.0
    %309 = vmatprep.subr.mxu0 0.0
    %310 = vmatpush2.msra.mxu0 0.0
    %311 = vmatprep.subr.mxu0 0.0
    %312 = vmatpush2.msra.mxu0 0.0
    %313 = vmatprep.subr.mxu0 0.0
    %314 = vmatpush2.msra.mxu0 0.0
    %315 = vmatprep.subr.mxu0 0.0
    %316 = vmatpush2.msra.mxu0 0.0
    %317 = vmatprep.subr.mxu0 0.0
    %318 = vmatpush2.msra.mxu0 0.0
    %319 = vmatprep.subr.mxu0 0.0
    %320 = vmatpush2.msra.mxu0 0.0
    %321 = vmatprep.subr.mxu0 0.0
    %322 = vmatpush2.msra.mxu0 0.0
    %323 = vmatprep.subr.mxu0 0.0
    %324 = vmatpush2.msra.mxu0 0.0
    %325 = vmatprep.subr.mxu0 0.0
    %326 = vmatpush2.msra.mxu0 0.0
    %327 = vmatprep.subr.mxu0 0.0
    %328 = vmatpush2.msra.mxu0 0.0
    %329 = vmatprep.mubr.f32.mxu0 0.0
    %330 = vmatmul.mubr.f32.gmra.mxu0 %v257
    %v331 = vpop.f32.mrf.mxu0
    %v332 = vadd.f32 0.0, %v331
    %v333 = vpop.f32.mrf.mxu0
    %334 = vmatprep.mubr.f32.mxu0 0.0
    %335 = vmatmul.mubr.f32.gmra.mxu0 %v259
    %v336 = vpop.f32.mrf.mxu0
    %v337 = vadd.f32 0.0, %v336
    %v338 = vpop.f32.mrf.mxu0
    %339 = vmatprep.mubr.f32.mxu0 0.0
    %340 = vmatmul.mubr.f32.gmra.mxu0 %v261
    %v341 = vpop.f32.mrf.mxu0
    %v342 = vadd.f32 0.0, %v341
    %v343 = vpop.f32.mrf.mxu0
    %344 = vmatprep.mubr.f32.mxu0 0.0
    %345 = vmatmul.mubr.f32.gmra.mxu0 %v263
    %v346 = vpop.f32.mrf.mxu0
    %v347 = vadd.f32 0.0, %v346
    %v348 = vpop.f32.mrf.mxu0
    %349 = vdwg.mxu0
    %v350 = vadd.f32 %v229, %v332
    %v351 = vadd.f32 %v234, %v337
    %v352 = vadd.f32 %v239, %v342
    %v353 = vadd.f32 %v244, %v347
    %v354 = vld [vmem:[#allocation5 + $0x30] sm:$0xff]
    %v355 = vld [vmem:[#allocation5 + $0x38] sm:$0xff]
    %vm356 = vcmask 1044480
    %v357 = vrot.slane %v40, 3
    %v358 = vrot.slane %v41, 3
    %v359 = vsel %vm356, %v357, %v358
    %v360 = vrot.slane %v42, 3
    %v361 = vsel %vm356, %v358, %v360
    %v362 = vrot.slane %v43, 3
    %v363 = vsel %vm356, %v360, %v362
    %v364 = vsel %vm60, %v359, 0
    %v366 = vsel %vm60, %v361, 0
    %v368 = vsel %vm60, %v363, 0
    %v370 = vsel %vm60, %v362, 0
    %372 = vmatprep.subr.mxu0 0.0
    %373 = vmatpush1.msra.mxu0 0.0
    %374 = vmatprep.subr.mxu0 0.0
    %375 = vmatpush1.msra.mxu0 0.0
    %376 = vmatprep.subr.mxu0 0.0
    %377 = vmatpush1.msra.mxu0 0.0
    %378 = vmatprep.subr.mxu0 0.0
    %379 = vmatpush1.msra.mxu0 0.0
    %380 = vmatprep.subr.mxu0 0.0
    %381 = vmatpush1.msra.mxu0 0.0
    %382 = vmatprep.subr.mxu0 0.0
    %383 = vmatpush1.msra.mxu0 0.0
    %384 = vmatprep.subr.mxu0 0.0
    %385 = vmatpush1.msra.mxu0 0.0
    %386 = vmatprep.subr.mxu0 0.0
    %387 = vmatpush1.msra.mxu0 0.0
    %388 = vmatprep.subr.mxu0 0.0
    %389 = vmatpush1.msra.mxu0 0.0
    %390 = vmatprep.subr.mxu0 0.0
    %391 = vmatpush1.msra.mxu0 0.0
    %392 = vmatprep.subr.mxu0 0.0
    %393 = vmatpush1.msra.mxu0 0.0
    %394 = vmatprep.subr.mxu0 0.0
    %395 = vmatpush1.msra.mxu0 0.0
    %396 = vmatprep.subr.mxu0 0.0
    %397 = vmatpush1.msra.mxu0 0.0
    %398 = vmatprep.subr.mxu0 0.0
    %399 = vmatpush1.msra.mxu0 0.0
    %400 = vmatprep.subr.mxu0 0.0
    %401 = vmatpush1.msra.mxu0 %v355
    %402 = vmatprep.subr.mxu0 0.0
    %403 = vmatpush1.msra.mxu0 %v354
    %404 = vmatprep.subr.mxu0 0.0
    %405 = vmatpush2.msra.mxu0 0.0
    %406 = vmatprep.subr.mxu0 0.0
    %407 = vmatpush2.msra.mxu0 0.0
    %408 = vmatprep.subr.mxu0 0.0
    %409 = vmatpush2.msra.mxu0 0.0
    %410 = vmatprep.subr.mxu0 0.0
    %411 = vmatpush2.msra.mxu0 0.0
    %412 = vmatprep.subr.mxu0 0.0
    %413 = vmatpush2.msra.mxu0 0.0
    %414 = vmatprep.subr.mxu0 0.0
    %415 = vmatpush2.msra.mxu0 0.0
    %416 = vmatprep.subr.mxu0 0.0
    %417 = vmatpush2.msra.mxu0 0.0
    %418 = vmatprep.subr.mxu0 0.0
    %419 = vmatpush2.msra.mxu0 0.0
    %420 = vmatprep.subr.mxu0 0.0
    %421 = vmatpush2.msra.mxu0 0.0
    %422 = vmatprep.subr.mxu0 0.0
    %423 = vmatpush2.msra.mxu0 0.0
    %424 = vmatprep.subr.mxu0 0.0
    %425 = vmatpush2.msra.mxu0 0.0
    %426 = vmatprep.subr.mxu0 0.0
    %427 = vmatpush2.msra.mxu0 0.0
    %428 = vmatprep.subr.mxu0 0.0
    %429 = vmatpush2.msra.mxu0 0.0
    %430 = vmatprep.subr.mxu0 0.0
    %431 = vmatpush2.msra.mxu0 0.0
    %432 = vmatprep.subr.mxu0 0.0
    %433 = vmatpush2.msra.mxu0 0.0
    %434 = vmatprep.subr.mxu0 0.0
    %435 = vmatpush2.msra.mxu0 0.0
    %436 = vmatprep.mubr.f32.mxu0 0.0
    %437 = vmatmul.mubr.f32.gmra.mxu0 %v364
    %v438 = vpop.f32.mrf.mxu0
    %v439 = vadd.f32 0.0, %v438
    %v440 = vpop.f32.mrf.mxu0
    %441 = vmatprep.mubr.f32.mxu0 0.0
    %442 = vmatmul.mubr.f32.gmra.mxu0 %v366
    %v443 = vpop.f32.mrf.mxu0
    %v444 = vadd.f32 0.0, %v443
    %v445 = vpop.f32.mrf.mxu0
    %446 = vmatprep.mubr.f32.mxu0 0.0
    %447 = vmatmul.mubr.f32.gmra.mxu0 %v368
    %v448 = vpop.f32.mrf.mxu0
    %v449 = vadd.f32 0.0, %v448
    %v450 = vpop.f32.mrf.mxu0
    %451 = vmatprep.mubr.f32.mxu0 0.0
    %452 = vmatmul.mubr.f32.gmra.mxu0 %v370
    %v453 = vpop.f32.mrf.mxu0
    %v454 = vadd.f32 0.0, %v453
    %v455 = vpop.f32.mrf.mxu0
    %456 = vdwg.mxu0
    %v457 = vadd.f32 %v350, %v439
    %v458 = vadd.f32 %v351, %v444
    %v459 = vadd.f32 %v352, %v449
    %v460 = vadd.f32 %v353, %v454
    %v461 = vld [vmem:[#allocation5 + $0x40] sm:$0xff]
    %v462 = vld [vmem:[#allocation5 + $0x48] sm:$0xff]
    %vm463 = vcmask 1043456
    %v464 = vrot.slane %v40, 4
    %v465 = vrot.slane %v41, 4
    %v466 = vsel %vm463, %v464, %v465
    %v467 = vrot.slane %v42, 4
    %v468 = vsel %vm463, %v465, %v467
    %v469 = vrot.slane %v43, 4
    %v470 = vsel %vm463, %v467, %v469
    %v471 = vsel %vm60, %v466, 0
    %v473 = vsel %vm60, %v468, 0
    %v475 = vsel %vm60, %v470, 0
    %v477 = vsel %vm60, %v469, 0
    %479 = vmatprep.subr.mxu0 0.0
    %480 = vmatpush1.msra.mxu0 0.0
    %481 = vmatprep.subr.mxu0 0.0
    %482 = vmatpush1.msra.mxu0 0.0
    %483 = vmatprep.subr.mxu0 0.0
    %484 = vmatpush1.msra.mxu0 0.0
    %485 = vmatprep.subr.mxu0 0.0
    %486 = vmatpush1.msra.mxu0 0.0
    %487 = vmatprep.subr.mxu0 0.0
    %488 = vmatpush1.msra.mxu0 0.0
    %489 = vmatprep.subr.mxu0 0.0
    %490 = vmatpush1.msra.mxu0 0.0
    %491 = vmatprep.subr.mxu0 0.0
    %492 = vmatpush1.msra.mxu0 0.0
    %493 = vmatprep.subr.mxu0 0.0
    %494 = vmatpush1.msra.mxu0 0.0
    %495 = vmatprep.subr.mxu0 0.0
    %496 = vmatpush1.msra.mxu0 0.0
    %497 = vmatprep.subr.mxu0 0.0
    %498 = vmatpush1.msra.mxu0 0.0
    %499 = vmatprep.subr.mxu0 0.0
    %500 = vmatpush1.msra.mxu0 0.0
    %501 = vmatprep.subr.mxu0 0.0
    %502 = vmatpush1.msra.mxu0 0.0
    %503 = vmatprep.subr.mxu0 0.0
    %504 = vmatpush1.msra.mxu0 0.0
    %505 = vmatprep.subr.mxu0 0.0
    %506 = vmatpush1.msra.mxu0 0.0
    %507 = vmatprep.subr.mxu0 0.0
    %508 = vmatpush1.msra.mxu0 %v462
    %509 = vmatprep.subr.mxu0 0.0
    %510 = vmatpush1.msra.mxu0 %v461
    %511 = vmatprep.subr.mxu0 0.0
    %512 = vmatpush2.msra.mxu0 0.0
    %513 = vmatprep.subr.mxu0 0.0
    %514 = vmatpush2.msra.mxu0 0.0
    %515 = vmatprep.subr.mxu0 0.0
    %516 = vmatpush2.msra.mxu0 0.0
    %517 = vmatprep.subr.mxu0 0.0
    %518 = vmatpush2.msra.mxu0 0.0
    %519 = vmatprep.subr.mxu0 0.0
    %520 = vmatpush2.msra.mxu0 0.0
    %521 = vmatprep.subr.mxu0 0.0
    %522 = vmatpush2.msra.mxu0 0.0
    %523 = vmatprep.subr.mxu0 0.0
    %524 = vmatpush2.msra.mxu0 0.0
    %525 = vmatprep.subr.mxu0 0.0
    %526 = vmatpush2.msra.mxu0 0.0
    %527 = vmatprep.subr.mxu0 0.0
    %528 = vmatpush2.msra.mxu0 0.0
    %529 = vmatprep.subr.mxu0 0.0
    %530 = vmatpush2.msra.mxu0 0.0
    %531 = vmatprep.subr.mxu0 0.0
    %532 = vmatpush2.msra.mxu0 0.0
    %533 = vmatprep.subr.mxu0 0.0
    %534 = vmatpush2.msra.mxu0 0.0
    %535 = vmatprep.subr.mxu0 0.0
    %536 = vmatpush2.msra.mxu0 0.0
    %537 = vmatprep.subr.mxu0 0.0
    %538 = vmatpush2.msra.mxu0 0.0
    %539 = vmatprep.subr.mxu0 0.0
    %540 = vmatpush2.msra.mxu0 0.0
    %541 = vmatprep.subr.mxu0 0.0
    %542 = vmatpush2.msra.mxu0 0.0
    %543 = vmatprep.mubr.f32.mxu0 0.0
    %544 = vmatmul.mubr.f32.gmra.mxu0 %v471
    %v545 = vpop.f32.mrf.mxu0
    %v546 = vadd.f32 0.0, %v545
    %v547 = vpop.f32.mrf.mxu0
    %548 = vmatprep.mubr.f32.mxu0 0.0
    %549 = vmatmul.mubr.f32.gmra.mxu0 %v473
    %v550 = vpop.f32.mrf.mxu0
    %v551 = vadd.f32 0.0, %v550
    %v552 = vpop.f32.mrf.mxu0
    %553 = vmatprep.mubr.f32.mxu0 0.0
    %554 = vmatmul.mubr.f32.gmra.mxu0 %v475
    %v555 = vpop.f32.mrf.mxu0
    %v556 = vadd.f32 0.0, %v555
    %v557 = vpop.f32.mrf.mxu0
    %558 = vmatprep.mubr.f32.mxu0 0.0
    %559 = vmatmul.mubr.f32.gmra.mxu0 %v477
    %v560 = vpop.f32.mrf.mxu0
    %v561 = vadd.f32 0.0, %v560
    %v562 = vpop.f32.mrf.mxu0
    %563 = vdwg.mxu0
    %v564 = vadd.f32 %v457, %v546
    %v565 = vadd.f32 %v458, %v551
    %v566 = vadd.f32 %v459, %v556
    %v567 = vadd.f32 %v460, %v561
    %v568 = vld [vmem:[#allocation5 + $0x1a8] sm:$0x1]
    %v569 = vlaneseq
    %v570 = vshrl.u32 %v569, 7
    %v571 = vsub.s32 0, %v570
    %v572 = vrot.slane %v568, %v571
    %v573 = vadd.f32 %v564, %v572
    %v574 = vadd.f32 %v565, %v572
    %v575 = vadd.f32 %v566, %v572
    %v576 = vadd.f32 %v567, %v572
    %v577 = vmax.f32 %v573, 0.0
    %v578 = vmax.f32 %v574, 0.0
    %v579 = vmax.f32 %v575, 0.0
    %v580 = vmax.f32 %v576, 0.0
    %v581 = vlaneseq
    %v582 = vshrl.u32 %v581, 7
    %v583 = vadd.s32 %v582, 8
    %v584 = vlaneseq
    %v585 = vand.u32 %v584, 127
    %vm586 = vcmp.ge.s32.totalorder %v582, 0
    %vm587 = vcmp.ge.s32.totalorder %v583, 0
    %vm588 = vcmp.lt.s32.totalorder %v582, 6
    %vm589 = vcmp.lt.s32.totalorder %v583, 6
    %vm590 = vmand %vm586, %vm588
    %vm591 = vmand %vm587, %vm589
    %v592 = vmul.u32 %v582, 2
    %v593 = vmul.u32 %v583, 2
    %vm594 = vcmp.eq.s32.totalorder %v585, %v592
    %vm595 = vcmp.eq.s32.totalorder %v585, %v593
    %vm596 = vmand %vm590, %vm594
    %vm597 = vmand %vm591, %vm595
    %v598 = vadd.s32 %v592, 1
    %v599 = vadd.s32 %v593, 1
    %vm600 = vcmp.eq.s32.totalorder %v585, %v598
    %vm601 = vcmp.eq.s32.totalorder %v585, %v599
    %vm602 = vmand %vm590, %vm600
    %vm603 = vmand %vm591, %vm601
    %vm604 = vcmp.ge.s32.totalorder %v582, 6
    %vm605 = vcmp.ge.s32.totalorder %v583, 6
    %vm606 = vcmp.lt.s32.totalorder %v582, 12
    %vm607 = vcmp.lt.s32.totalorder %v583, 12
    %vm608 = vmand %vm604, %vm606
    %vm609 = vmand %vm605, %vm607
    %v610 = vadd.s32 %v592, 4
    %v611 = vadd.s32 %v593, 4
    %vm612 = vcmp.eq.s32.totalorder %v585, %v610
    %vm613 = vcmp.eq.s32.totalorder %v585, %v611
    %vm614 = vmand %vm608, %vm612
    %vm615 = vmand %vm609, %vm613
    %v616 = vadd.s32 %v610, 1
    %v617 = vadd.s32 %v611, 1
    %vm618 = vcmp.eq.s32.totalorder %v585, %v616
    %vm619 = vcmp.eq.s32.totalorder %v585, %v617
    %vm620 = vmand %vm608, %vm618
    %vm621 = vmand %vm609, %vm619
    %vm622 = vmor %vm596, %vm614
    %vm623 = vmor %vm597, %vm615
    %vm624 = vmor %vm602, %vm620
    %vm625 = vmor %vm603, %vm621
    %v626 = vsel %vm622, 1, 0
    %v627 = vsel %vm623, 1, 0
    %v628 = vcvt.s32.f32 %v626
    %v629 = vcvt.s32.f32 %v627
    %v630 = vsel %vm624, 1, 0
    %v631 = vsel %vm625, 1, 0
    %v632 = vcvt.s32.f32 %v630
    %v633 = vcvt.s32.f32 %v631
    %vm634 = vcmask 228352
    %v636 = vsel %vm634, %v628, 0
    %v639 = vsel %vm634, %v629, 0
    %v642 = vsel %vm463, %v580, 0
    %644 = vmatprep.subr.mxu0 0.0
    %645 = vmatpush1.msra.mxu0 0.0
    %646 = vmatprep.subr.mxu0 0.0
    %647 = vmatpush1.msra.mxu0 0.0
    %648 = vmatprep.subr.mxu0 0.0
    %649 = vmatpush1.msra.mxu0 0.0
    %650 = vmatprep.subr.mxu0 0.0
    %651 = vmatpush1.msra.mxu0 0.0
    %652 = vmatprep.subr.mxu0 0.0
    %653 = vmatpush1.msra.mxu0 0.0
    %654 = vmatprep.subr.mxu0 0.0
    %655 = vmatpush1.msra.mxu0 0.0
    %656 = vmatprep.subr.mxu0 0.0
    %657 = vmatpush1.msra.mxu0 0.0
    %658 = vmatprep.subr.mxu0 0.0
    %659 = vmatpush1.msra.mxu0 0.0
    %660 = vmatprep.subr.mxu0 0.0
    %661 = vmatpush1.msra.mxu0 0.0
    %662 = vmatprep.subr.mxu0 0.0
    %663 = vmatpush1.msra.mxu0 0.0
    %664 = vmatprep.subr.mxu0 0.0
    %665 = vmatpush1.msra.mxu0 0.0
    %666 = vmatprep.subr.mxu0 0.0
    %667 = vmatpush1.msra.mxu0 0.0
    %668 = vmatprep.subr.mxu0 0.0
    %669 = vmatpush1.msra.mxu0 %v642
    %670 = vmatprep.subr.mxu0 0.0
    %671 = vmatpush1.msra.mxu0 %v579
    %672 = vmatprep.subr.mxu0 0.0
    %673 = vmatpush1.msra.mxu0 %v578
    %674 = vmatprep.subr.mxu0 0.0
    %675 = vmatpush1.msra.mxu0 %v577
    %676 = vmatprep.subr.mxu0 0.0
    %677 = vmatpush2.msra.mxu0 0.0
    %678 = vmatprep.subr.mxu0 0.0
    %679 = vmatpush2.msra.mxu0 0.0
    %680 = vmatprep.subr.mxu0 0.0
    %681 = vmatpush2.msra.mxu0 0.0
    %682 = vmatprep.subr.mxu0 0.0
    %683 = vmatpush2.msra.mxu0 0.0
    %684 = vmatprep.subr.mxu0 0.0
    %685 = vmatpush2.msra.mxu0 0.0
    %686 = vmatprep.subr.mxu0 0.0
    %687 = vmatpush2.msra.mxu0 0.0
    %688 = vmatprep.subr.mxu0 0.0
    %689 = vmatpush2.msra.mxu0 0.0
    %690 = vmatprep.subr.mxu0 0.0
    %691 = vmatpush2.msra.mxu0 0.0
    %692 = vmatprep.subr.mxu0 0.0
    %693 = vmatpush2.msra.mxu0 0.0
    %694 = vmatprep.subr.mxu0 0.0
    %695 = vmatpush2.msra.mxu0 0.0
    %696 = vmatprep.subr.mxu0 0.0
    %697 = vmatpush2.msra.mxu0 0.0
    %698 = vmatprep.subr.mxu0 0.0
    %699 = vmatpush2.msra.mxu0 0.0
    %700 = vmatprep.subr.mxu0 0.0
    %701 = vmatpush2.msra.mxu0 0.0
    %702 = vmatprep.subr.mxu0 0.0
    %703 = vmatpush2.msra.mxu0 0.0
    %704 = vmatprep.subr.mxu0 0.0
    %705 = vmatpush2.msra.mxu0 0.0
    %706 = vmatprep.subr.mxu0 0.0
    %707 = vmatpush2.msra.mxu0 0.0
    %708 = vmatprep.mubr.f32.mxu0 0.0
    %709 = vmatmul.mubr.f32.gmra.mxu0 %v636
    %v710 = vpop.f32.mrf.mxu0
    %v711 = vadd.f32 0.0, %v710
    %v712 = vpop.f32.mrf.mxu0
    %713 = vmatprep.mubr.f32.mxu0 0.0
    %714 = vmatmul.mubr.f32.gmra.mxu0 %v639
    %v715 = vpop.f32.mrf.mxu0
    %v716 = vadd.f32 0.0, %v715
    %v717 = vpop.f32.mrf.mxu0
    %718 = vdwg.mxu0
    %v720 = vsel %vm634, %v632, 0
    %v723 = vsel %vm634, %v633, 0
    %725 = vmatprep.subr.mxu0 0.0
    %726 = vmatpush1.msra.mxu0 0.0
    %727 = vmatprep.subr.mxu0 0.0
    %728 = vmatpush1.msra.mxu0 0.0
    %729 = vmatprep.subr.mxu0 0.0
    %730 = vmatpush1.msra.mxu0 0.0
    %731 = vmatprep.subr.mxu0 0.0
    %732 = vmatpush1.msra.mxu0 0.0
    %733 = vmatprep.subr.mxu0 0.0
    %734 = vmatpush1.msra.mxu0 0.0
    %735 = vmatprep.subr.mxu0 0.0
    %736 = vmatpush1.msra.mxu0 0.0
    %737 = vmatprep.subr.mxu0 0.0
    %738 = vmatpush1.msra.mxu0 0.0
    %739 = vmatprep.subr.mxu0 0.0
    %740 = vmatpush1.msra.mxu0 0.0
    %741 = vmatprep.subr.mxu0 0.0
    %742 = vmatpush1.msra.mxu0 0.0
    %743 = vmatprep.subr.mxu0 0.0
    %744 = vmatpush1.msra.mxu0 0.0
    %745 = vmatprep.subr.mxu0 0.0
    %746 = vmatpush1.msra.mxu0 0.0
    %747 = vmatprep.subr.mxu0 0.0
    %748 = vmatpush1.msra.mxu0 0.0
    %749 = vmatprep.subr.mxu0 0.0
    %750 = vmatpush1.msra.mxu0 %v642
    %751 = vmatprep.subr.mxu0 0.0
    %752 = vmatpush1.msra.mxu0 %v579
    %753 = vmatprep.subr.mxu0 0.0
    %754 = vmatpush1.msra.mxu0 %v578
    %755 = vmatprep.subr.mxu0 0.0
    %756 = vmatpush1.msra.mxu0 %v577
    %757 = vmatprep.subr.mxu0 0.0
    %758 = vmatpush2.msra.mxu0 0.0
    %759 = vmatprep.subr.mxu0 0.0
    %760 = vmatpush2.msra.mxu0 0.0
    %761 = vmatprep.subr.mxu0 0.0
    %762 = vmatpush2.msra.mxu0 0.0
    %763 = vmatprep.subr.mxu0 0.0
    %764 = vmatpush2.msra.mxu0 0.0
    %765 = vmatprep.subr.mxu0 0.0
    %766 = vmatpush2.msra.mxu0 0.0
    %767 = vmatprep.subr.mxu0 0.0
    %768 = vmatpush2.msra.mxu0 0.0
    %769 = vmatprep.subr.mxu0 0.0
    %770 = vmatpush2.msra.mxu0 0.0
    %771 = vmatprep.subr.mxu0 0.0
    %772 = vmatpush2.msra.mxu0 0.0
    %773 = vmatprep.subr.mxu0 0.0
    %774 = vmatpush2.msra.mxu0 0.0
    %775 = vmatprep.subr.mxu0 0.0
    %776 = vmatpush2.msra.mxu0 0.0
    %777 = vmatprep.subr.mxu0 0.0
    %778 = vmatpush2.msra.mxu0 0.0
    %779 = vmatprep.subr.mxu0 0.0
    %780 = vmatpush2.msra.mxu0 0.0
    %781 = vmatprep.subr.mxu0 0.0
    %782 = vmatpush2.msra.mxu0 0.0
    %783 = vmatprep.subr.mxu0 0.0
    %784 = vmatpush2.msra.mxu0 0.0
    %785 = vmatprep.subr.mxu0 0.0
    %786 = vmatpush2.msra.mxu0 0.0
    %787 = vmatprep.subr.mxu0 0.0
    %788 = vmatpush2.msra.mxu0 0.0
    %789 = vmatprep.mubr.f32.mxu0 0.0
    %790 = vmatmul.mubr.f32.gmra.mxu0 %v720
    %v791 = vpop.f32.mrf.mxu0
    %v792 = vadd.f32 0.0, %v791
    %v793 = vpop.f32.mrf.mxu0
    %794 = vmatprep.mubr.f32.mxu0 0.0
    %795 = vmatmul.mubr.f32.gmra.mxu0 %v723
    %v796 = vpop.f32.mrf.mxu0
    %v797 = vadd.f32 0.0, %v796
    %v798 = vpop.f32.mrf.mxu0
    %799 = vdwg.mxu0
    %v800 = vmax.f32 %v711, %v792
    %v801 = vmax.f32 %v716, %v797
    %v802 = vld [vmem:[#allocation5 + $0x118] sm:$0xff]
    %v803 = vld [vmem:[#allocation5 + $0x120] sm:$0xff]
    %v804 = vld [vmem:[#allocation5 + $0x128] sm:$0xff]
    %v805 = vld [vmem:[#allocation5 + $0x130] sm:$0xff]
    %v806 = vld [vmem:[#allocation5 + $0x138] sm:$0xff]
    %v807 = vld [vmem:[#allocation5 + $0x140] sm:$0xff]
    %v808 = vld [vmem:[#allocation5 + $0x148] sm:$0xff]
    %v809 = vld [vmem:[#allocation5 + $0x150] sm:$0xff]
    %v810 = vld [vmem:[#allocation5 + $0x158] sm:$0xff]
    %v811 = vld [vmem:[#allocation5 + $0x160] sm:$0xff]
    %v812 = vld [vmem:[#allocation5 + $0x168] sm:$0xff]
    %v813 = vld [vmem:[#allocation5 + $0x170] sm:$0xff]
    %v814 = vld [vmem:[#allocation5 + $0x178] sm:$0xff]
    %v815 = vld [vmem:[#allocation5 + $0x180] sm:$0xff]
    %v816 = vld [vmem:[#allocation5 + $0x188] sm:$0xff]
    %v817 = vld [vmem:[#allocation5 + $0x190] sm:$0xff]
    %v818 = vld [vmem:[#allocation5 + $0x198] sm:$0xff]
    %v819 = vld [vmem:[#allocation5 + $0x1a0] sm:$0xff]
    %vm820 = vcmask 588800
    %v822 = vsel %vm820, %v800, 0
    %v825 = vsel %vm820, %v801, 0
    %827 = vmatprep.subr.mxu0 0.0
    %828 = vmatpush1.msra.mxu0 0.0
    %829 = vmatprep.subr.mxu0 0.0
    %830 = vmatpush1.msra.mxu0 0.0
    %831 = vmatprep.subr.mxu0 0.0
    %832 = vmatpush1.msra.mxu0 0.0
    %833 = vmatprep.subr.mxu0 0.0
    %834 = vmatpush1.msra.mxu0 0.0
    %835 = vmatprep.subr.mxu0 0.0
    %836 = vmatpush1.msra.mxu0 0.0
    %837 = vmatprep.subr.mxu0 0.0
    %838 = vmatpush1.msra.mxu0 0.0
    %839 = vmatprep.subr.mxu0 0.0
    %840 = vmatpush1.msra.mxu0 0.0
    %841 = vmatprep.subr.mxu0 0.0
    %842 = vmatpush1.msra.mxu0 %v810
    %843 = vmatprep.subr.mxu0 0.0
    %844 = vmatpush1.msra.mxu0 %v809
    %845 = vmatprep.subr.mxu0 0.0
    %846 = vmatpush1.msra.mxu0 %v808
    %847 = vmatprep.subr.mxu0 0.0
    %848 = vmatpush1.msra.mxu0 %v807
    %849 = vmatprep.subr.mxu0 0.0
    %850 = vmatpush1.msra.mxu0 %v806
    %851 = vmatprep.subr.mxu0 0.0
    %852 = vmatpush1.msra.mxu0 %v805
    %853 = vmatprep.subr.mxu0 0.0
    %854 = vmatpush1.msra.mxu0 %v804
    %855 = vmatprep.subr.mxu0 0.0
    %856 = vmatpush1.msra.mxu0 %v803
    %857 = vmatprep.subr.mxu0 0.0
    %858 = vmatpush1.msra.mxu0 %v802
    %859 = vmatprep.subr.mxu0 0.0
    %860 = vmatpush2.msra.mxu0 0.0
    %861 = vmatprep.subr.mxu0 0.0
    %862 = vmatpush2.msra.mxu0 0.0
    %863 = vmatprep.subr.mxu0 0.0
    %864 = vmatpush2.msra.mxu0 0.0
    %865 = vmatprep.subr.mxu0 0.0
    %866 = vmatpush2.msra.mxu0 0.0
    %867 = vmatprep.subr.mxu0 0.0
    %868 = vmatpush2.msra.mxu0 0.0
    %869 = vmatprep.subr.mxu0 0.0
    %870 = vmatpush2.msra.mxu0 0.0
    %871 = vmatprep.subr.mxu0 0.0
    %872 = vmatpush2.msra.mxu0 0.0
    %873 = vmatprep.subr.mxu0 0.0
    %874 = vmatpush2.msra.mxu0 0.0
    %875 = vmatprep.subr.mxu0 0.0
    %876 = vmatpush2.msra.mxu0 0.0
    %877 = vmatprep.subr.mxu0 0.0
    %878 = vmatpush2.msra.mxu0 0.0
    %879 = vmatprep.subr.mxu0 0.0
    %880 = vmatpush2.msra.mxu0 0.0
    %881 = vmatprep.subr.mxu0 0.0
    %882 = vmatpush2.msra.mxu0 0.0
    %883 = vmatprep.subr.mxu0 0.0
    %884 = vmatpush2.msra.mxu0 0.0
    %885 = vmatprep.subr.mxu0 0.0
    %886 = vmatpush2.msra.mxu0 0.0
    %887 = vmatprep.subr.mxu0 0.0
    %888 = vmatpush2.msra.mxu0 0.0
    %889 = vmatprep.subr.mxu0 0.0
    %890 = vmatpush2.msra.mxu0 0.0
    %891 = vmatprep.mubr.f32.mxu0 0.0
    %892 = vmatmul.mubr.f32.gmra.mxu0 %v822
    %v893 = vpop.f32.mrf.mxu0
    %v894 = vadd.f32 0.0, %v893
    %v895 = vpop.f32.mrf.mxu0
    %896 = vmatprep.mubr.f32.mxu0 0.0
    %897 = vmatmul.mubr.f32.gmra.mxu0 %v825
    %v898 = vpop.f32.mrf.mxu0
    %v899 = vadd.f32 0.0, %v898
    %v900 = vpop.f32.mrf.mxu0
    %901 = vdwg.mxu0
    %902 = vmatprep.subr.mxu0 0.0
    %903 = vmatpush1.msra.mxu0 0.0
    %904 = vmatprep.subr.mxu0 0.0
    %905 = vmatpush1.msra.mxu0 0.0
    %906 = vmatprep.subr.mxu0 0.0
    %907 = vmatpush1.msra.mxu0 0.0
    %908 = vmatprep.subr.mxu0 0.0
    %909 = vmatpush1.msra.mxu0 0.0
    %910 = vmatprep.subr.mxu0 0.0
    %911 = vmatpush1.msra.mxu0 0.0
    %912 = vmatprep.subr.mxu0 0.0
    %913 = vmatpush1.msra.mxu0 0.0
    %914 = vmatprep.subr.mxu0 0.0
    %915 = vmatpush1.msra.mxu0 0.0
    %916 = vmatprep.subr.mxu0 0.0
    %917 = vmatpush1.msra.mxu0 %v819
    %918 = vmatprep.subr.mxu0 0.0
    %919 = vmatpush1.msra.mxu0 %v818
    %920 = vmatprep.subr.mxu0 0.0
    %921 = vmatpush1.msra.mxu0 %v817
    %922 = vmatprep.subr.mxu0 0.0
    %923 = vmatpush1.msra.mxu0 %v816
    %924 = vmatprep.subr.mxu0 0.0
    %925 = vmatpush1.msra.mxu0 %v815
    %926 = vmatprep.subr.mxu0 0.0
    %927 = vmatpush1.msra.mxu0 %v814
    %928 = vmatprep.subr.mxu0 0.0
    %929 = vmatpush1.msra.mxu0 %v813
    %930 = vmatprep.subr.mxu0 0.0
    %931 = vmatpush1.msra.mxu0 %v812
    %932 = vmatprep.subr.mxu0 0.0
    %933 = vmatpush1.msra.mxu0 %v811
    %934 = vmatprep.subr.mxu0 0.0
    %935 = vmatpush2.msra.mxu0 0.0
    %936 = vmatprep.subr.mxu0 0.0
    %937 = vmatpush2.msra.mxu0 0.0
    %938 = vmatprep.subr.mxu0 0.0
    %939 = vmatpush2.msra.mxu0 0.0
    %940 = vmatprep.subr.mxu0 0.0
    %941 = vmatpush2.msra.mxu0 0.0
    %942 = vmatprep.subr.mxu0 0.0
    %943 = vmatpush2.msra.mxu0 0.0
    %944 = vmatprep.subr.mxu0 0.0
    %945 = vmatpush2.msra.mxu0 0.0
    %946 = vmatprep.subr.mxu0 0.0
    %947 = vmatpush2.msra.mxu0 0.0
    %948 = vmatprep.subr.mxu0 0.0
    %949 = vmatpush2.msra.mxu0 0.0
    %950 = vmatprep.subr.mxu0 0.0
    %951 = vmatpush2.msra.mxu0 0.0
    %952 = vmatprep.subr.mxu0 0.0
    %953 = vmatpush2.msra.mxu0 0.0
    %954 = vmatprep.subr.mxu0 0.0
    %955 = vmatpush2.msra.mxu0 0.0
    %956 = vmatprep.subr.mxu0 0.0
    %957 = vmatpush2.msra.mxu0 0.0
    %958 = vmatprep.subr.mxu0 0.0
    %959 = vmatpush2.msra.mxu0 0.0
    %960 = vmatprep.subr.mxu0 0.0
    %961 = vmatpush2.msra.mxu0 0.0
    %962 = vmatprep.subr.mxu0 0.0
    %963 = vmatpush2.msra.mxu0 0.0
    %964 = vmatprep.subr.mxu0 0.0
    %965 = vmatpush2.msra.mxu0 0.0
    %966 = vmatprep.mubr.f32.mxu0 0.0
    %967 = vmatmul.mubr.f32.gmra.mxu0 %v822
    %v968 = vpop.f32.mrf.mxu0
    %v969 = vadd.f32 0.0, %v968
    %v970 = vpop.f32.mrf.mxu0
    %971 = vmatprep.mubr.f32.mxu0 0.0
    %972 = vmatmul.mubr.f32.gmra.mxu0 %v825
    %v973 = vpop.f32.mrf.mxu0
    %v974 = vadd.f32 0.0, %v973
    %v975 = vpop.f32.mrf.mxu0
    %976 = vdwg.mxu0
    %v977 = vmax.f32 %v894, %v969
    %v978 = vmax.f32 %v899, %v974
    %v979 = vld [vmem:[#allocation5 + $0x50] sm:$0xff]
    %v980 = vld [vmem:[#allocation5 + $0x58] sm:$0xff]
    %v981 = vld [vmem:[#allocation5 + $0x60] sm:$0xff]
    %v982 = vld [vmem:[#allocation5 + $0x68] sm:$0xff]
    %v983 = vld [vmem:[#allocation5 + $0x70] sm:$0xf]
    %v984 = vld [vmem:[#allocation5 + $0x78] sm:$0xff]
    %v985 = vld [vmem:[#allocation5 + $0x80] sm:$0xff]
    %v986 = vld [vmem:[#allocation5 + $0x88] sm:$0xff]
    %v987 = vld [vmem:[#allocation5 + $0x90] sm:$0xff]
    %v988 = vld [vmem:[#allocation5 + $0x98] sm:$0xf]
    %v991 = vrot.slane %v977, 1
    %v992 = vrot.slane %v978, 1
    %v993 = vsel %vm52, %v991, %v992
    %vm994 = vcmask 293888
    %v995 = vsel %vm994, %v993, 0
    %v998 = vsel %vm463, %v988, 0
    %1000 = vmatprep.subr.mxu0 0.0
    %1001 = vmatpush1.msra.mxu0 0.0
    %1002 = vmatprep.subr.mxu0 0.0
    %1003 = vmatpush1.msra.mxu0 0.0
    %1004 = vmatprep.subr.mxu0 0.0
    %1005 = vmatpush1.msra.mxu0 0.0
    %1006 = vmatprep.subr.mxu0 0.0
    %1007 = vmatpush1.msra.mxu0 0.0
    %1008 = vmatprep.subr.mxu0 0.0
    %1009 = vmatpush1.msra.mxu0 0.0
    %1010 = vmatprep.subr.mxu0 0.0
    %1011 = vmatpush1.msra.mxu0 0.0
    %1012 = vmatprep.subr.mxu0 0.0
    %1013 = vmatpush1.msra.mxu0 0.0
    %1014 = vmatprep.subr.mxu0 0.0
    %1015 = vmatpush1.msra.mxu0 0.0
    %1016 = vmatprep.subr.mxu0 0.0
    %1017 = vmatpush1.msra.mxu0 0.0
    %1018 = vmatprep.subr.mxu0 0.0
    %1019 = vmatpush1.msra.mxu0 0.0
    %1020 = vmatprep.subr.mxu0 0.0
    %1021 = vmatpush1.msra.mxu0 0.0
    %1022 = vmatprep.subr.mxu0 0.0
    %1023 = vmatpush1.msra.mxu0 %v998
    %1024 = vmatprep.subr.mxu0 0.0
    %1025 = vmatpush1.msra.mxu0 %v987
    %1026 = vmatprep.subr.mxu0 0.0
    %1027 = vmatpush1.msra.mxu0 %v986
    %1028 = vmatprep.subr.mxu0 0.0
    %1029 = vmatpush1.msra.mxu0 %v985
    %1030 = vmatprep.subr.mxu0 0.0
    %1031 = vmatpush1.msra.mxu0 %v984
    %1032 = vmatprep.subr.mxu0 0.0
    %1033 = vmatpush2.msra.mxu0 0.0
    %1034 = vmatprep.subr.mxu0 0.0
    %1035 = vmatpush2.msra.mxu0 0.0
    %1036 = vmatprep.subr.mxu0 0.0
    %1037 = vmatpush2.msra.mxu0 0.0
    %1038 = vmatprep.subr.mxu0 0.0
    %1039 = vmatpush2.msra.mxu0 0.0
    %1040 = vmatprep.subr.mxu0 0.0
    %1041 = vmatpush2.msra.mxu0 0.0
    %1042 = vmatprep.subr.mxu0 0.0
    %1043 = vmatpush2.msra.mxu0 0.0
    %1044 = vmatprep.subr.mxu0 0.0
    %1045 = vmatpush2.msra.mxu0 0.0
    %1046 = vmatprep.subr.mxu0 0.0
    %1047 = vmatpush2.msra.mxu0 0.0
    %1048 = vmatprep.subr.mxu0 0.0
    %1049 = vmatpush2.msra.mxu0 0.0
    %1050 = vmatprep.subr.mxu0 0.0
    %1051 = vmatpush2.msra.mxu0 0.0
    %1052 = vmatprep.subr.mxu0 0.0
    %1053 = vmatpush2.msra.mxu0 0.0
    %1054 = vmatprep.subr.mxu0 0.0
    %1055 = vmatpush2.msra.mxu0 0.0
    %1056 = vmatprep.subr.mxu0 0.0
    %1057 = vmatpush2.msra.mxu0 0.0
    %1058 = vmatprep.subr.mxu0 0.0
    %1059 = vmatpush2.msra.mxu0 0.0
    %1060 = vmatprep.subr.mxu0 0.0
    %1061 = vmatpush2.msra.mxu0 0.0
    %1062 = vmatprep.subr.mxu0 0.0
    %1063 = vmatpush2.msra.mxu0 0.0
    %1064 = vmatprep.mubr.f32.mxu0 0.0
    %1065 = vmatmul.mubr.f32.gmra.mxu0 %v995
    %v1066 = vpop.f32.mrf.mxu0
    %v1067 = vadd.f32 0.0, %v1066
    %v1068 = vpop.f32.mrf.mxu0
    %1069 = vdwg.mxu0
    %v1070 = vsel %vm994, %v977, 0
    %v1073 = vsel %vm463, %v983, 0
    %1075 = vmatprep.subr.mxu0 0.0
    %1076 = vmatpush1.msra.mxu0 0.0
    %1077 = vmatprep.subr.mxu0 0.0
    %1078 = vmatpush1.msra.mxu0 0.0
    %1079 = vmatprep.subr.mxu0 0.0
    %1080 = vmatpush1.msra.mxu0 0.0
    %1081 = vmatprep.subr.mxu0 0.0
    %1082 = vmatpush1.msra.mxu0 0.0
    %1083 = vmatprep.subr.mxu0 0.0
    %1084 = vmatpush1.msra.mxu0 0.0
    %1085 = vmatprep.subr.mxu0 0.0
    %1086 = vmatpush1.msra.mxu0 0.0
    %1087 = vmatprep.subr.mxu0 0.0
    %1088 = vmatpush1.msra.mxu0 0.0
    %1089 = vmatprep.subr.mxu0 0.0
    %1090 = vmatpush1.msra.mxu0 0.0
    %1091 = vmatprep.subr.mxu0 0.0
    %1092 = vmatpush1.msra.mxu0 0.0
    %1093 = vmatprep.subr.mxu0 0.0
    %1094 = vmatpush1.msra.mxu0 0.0
    %1095 = vmatprep.subr.mxu0 0.0
    %1096 = vmatpush1.msra.mxu0 0.0
    %1097 = vmatprep.subr.mxu0 0.0
    %1098 = vmatpush1.msra.mxu0 %v1073
    %1099 = vmatprep.subr.mxu0 0.0
    %1100 = vmatpush1.msra.mxu0 %v982
    %1101 = vmatprep.subr.mxu0 0.0
    %1102 = vmatpush1.msra.mxu0 %v981
    %1103 = vmatprep.subr.mxu0 0.0
    %1104 = vmatpush1.msra.mxu0 %v980
    %1105 = vmatprep.subr.mxu0 0.0
    %1106 = vmatpush1.msra.mxu0 %v979
    %1107 = vmatprep.subr.mxu0 0.0
    %1108 = vmatpush2.msra.mxu0 0.0
    %1109 = vmatprep.subr.mxu0 0.0
    %1110 = vmatpush2.msra.mxu0 0.0
    %1111 = vmatprep.subr.mxu0 0.0
    %1112 = vmatpush2.msra.mxu0 0.0
    %1113 = vmatprep.subr.mxu0 0.0
    %1114 = vmatpush2.msra.mxu0 0.0
    %1115 = vmatprep.subr.mxu0 0.0
    %1116 = vmatpush2.msra.mxu0 0.0
    %1117 = vmatprep.subr.mxu0 0.0
    %1118 = vmatpush2.msra.mxu0 0.0
    %1119 = vmatprep.subr.mxu0 0.0
    %1120 = vmatpush2.msra.mxu0 0.0
    %1121 = vmatprep.subr.mxu0 0.0
    %1122 = vmatpush2.msra.mxu0 0.0
    %1123 = vmatprep.subr.mxu0 0.0
    %1124 = vmatpush2.msra.mxu0 0.0
    %1125 = vmatprep.subr.mxu0 0.0
    %1126 = vmatpush2.msra.mxu0 0.0
    %1127 = vmatprep.subr.mxu0 0.0
    %1128 = vmatpush2.msra.mxu0 0.0
    %1129 = vmatprep.subr.mxu0 0.0
    %1130 = vmatpush2.msra.mxu0 0.0
    %1131 = vmatprep.subr.mxu0 0.0
    %1132 = vmatpush2.msra.mxu0 0.0
    %1133 = vmatprep.subr.mxu0 0.0
    %1134 = vmatpush2.msra.mxu0 0.0
    %1135 = vmatprep.subr.mxu0 0.0
    %1136 = vmatpush2.msra.mxu0 0.0
    %1137 = vmatprep.subr.mxu0 0.0
    %1138 = vmatpush2.msra.mxu0 0.0
    %1139 = vmatprep.mubr.f32.mxu0 0.0
    %1140 = vmatmul.mubr.f32.gmra.mxu0 %v1070
    %v1141 = vpop.f32.mrf.mxu0
    %v1142 = vadd.f32 %v1067, %v1141
    %v1143 = vpop.f32.mrf.mxu0
    %1144 = vdwg.mxu0
    %v1145 = vld [vmem:[#allocation5 + $0xa0] sm:$0xff]
    %v1146 = vld [vmem:[#allocation5 + $0xa8] sm:$0xff]
    %v1147 = vld [vmem:[#allocation5 + $0xb0] sm:$0xff]
    %v1148 = vld [vmem:[#allocation5 + $0xb8] sm:$0xff]
    %v1149 = vld [vmem:[#allocation5 + $0xc0] sm:$0xf]
    %v1150 = vrot.slane %v977, 2
    %v1151 = vrot.slane %v978, 2
    %v1152 = vsel %vm249, %v1150, %v1151
    %v1153 = vsel %vm994, %v1152, 0
    %v1156 = vsel %vm463, %v1149, 0
    %1158 = vmatprep.subr.mxu0 0.0
    %1159 = vmatpush1.msra.mxu0 0.0
    %1160 = vmatprep.subr.mxu0 0.0
    %1161 = vmatpush1.msra.mxu0 0.0
    %1162 = vmatprep.subr.mxu0 0.0
    %1163 = vmatpush1.msra.mxu0 0.0
    %1164 = vmatprep.subr.mxu0 0.0
    %1165 = vmatpush1.msra.mxu0 0.0
    %1166 = vmatprep.subr.mxu0 0.0
    %1167 = vmatpush1.msra.mxu0 0.0
    %1168 = vmatprep.subr.mxu0 0.0
    %1169 = vmatpush1.msra.mxu0 0.0
    %1170 = vmatprep.subr.mxu0 0.0
    %1171 = vmatpush1.msra.mxu0 0.0
    %1172 = vmatprep.subr.mxu0 0.0
    %1173 = vmatpush1.msra.mxu0 0.0
    %1174 = vmatprep.subr.mxu0 0.0
    %1175 = vmatpush1.msra.mxu0 0.0
    %1176 = vmatprep.subr.mxu0 0.0
    %1177 = vmatpush1.msra.mxu0 0.0
    %1178 = vmatprep.subr.mxu0 0.0
    %1179 = vmatpush1.msra.mxu0 0.0
    %1180 = vmatprep.subr.mxu0 0.0
    %1181 = vmatpush1.msra.mxu0 %v1156
    %1182 = vmatprep.subr.mxu0 0.0
    %1183 = vmatpush1.msra.mxu0 %v1148
    %1184 = vmatprep.subr.mxu0 0.0
    %1185 = vmatpush1.msra.mxu0 %v1147
    %1186 = vmatprep.subr.mxu0 0.0
    %1187 = vmatpush1.msra.mxu0 %v1146
    %1188 = vmatprep.subr.mxu0 0.0
    %1189 = vmatpush1.msra.mxu0 %v1145
    %1190 = vmatprep.subr.mxu0 0.0
    %1191 = vmatpush2.msra.mxu0 0.0
    %1192 = vmatprep.subr.mxu0 0.0
    %1193 = vmatpush2.msra.mxu0 0.0
    %1194 = vmatprep.subr.mxu0 0.0
    %1195 = vmatpush2.msra.mxu0 0.0
    %1196 = vmatprep.subr.mxu0 0.0
    %1197 = vmatpush2.msra.mxu0 0.0
    %1198 = vmatprep.subr.mxu0 0.0
    %1199 = vmatpush2.msra.mxu0 0.0
    %1200 = vmatprep.subr.mxu0 0.0
    %1201 = vmatpush2.msra.mxu0 0.0
    %1202 = vmatprep.subr.mxu0 0.0
    %1203 = vmatpush2.msra.mxu0 0.0
    %1204 = vmatprep.subr.mxu0 0.0
    %1205 = vmatpush2.msra.mxu0 0.0
    %1206 = vmatprep.subr.mxu0 0.0
    %1207 = vmatpush2.msra.mxu0 0.0
    %1208 = vmatprep.subr.mxu0 0.0
    %1209 = vmatpush2.msra.mxu0 0.0
    %1210 = vmatprep.subr.mxu0 0.0
    %1211 = vmatpush2.msra.mxu0 0.0
    %1212 = vmatprep.subr.mxu0 0.0
    %1213 = vmatpush2.msra.mxu0 0.0
    %1214 = vmatprep.subr.mxu0 0.0
    %1215 = vmatpush2.msra.mxu0 0.0
    %1216 = vmatprep.subr.mxu0 0.0
    %1217 = vmatpush2.msra.mxu0 0.0
    %1218 = vmatprep.subr.mxu0 0.0
    %1219 = vmatpush2.msra.mxu0 0.0
    %1220 = vmatprep.subr.mxu0 0.0
    %1221 = vmatpush2.msra.mxu0 0.0
    %1222 = vmatprep.mubr.f32.mxu0 0.0
    %1223 = vmatmul.mubr.f32.gmra.mxu0 %v1153
    %v1224 = vpop.f32.mrf.mxu0
    %v1225 = vadd.f32 0.0, %v1224
    %v1226 = vpop.f32.mrf.mxu0
    %1227 = vdwg.mxu0
    %v1228 = vadd.f32 %v1142, %v1225
    %v1229 = vld [vmem:[#allocation5 + $0xc8] sm:$0xff]
    %v1230 = vld [vmem:[#allocation5 + $0xd0] sm:$0xff]
    %v1231 = vld [vmem:[#allocation5 + $0xd8] sm:$0xff]
    %v1232 = vld [vmem:[#allocation5 + $0xe0] sm:$0xff]
    %v1233 = vld [vmem:[#allocation5 + $0xe8] sm:$0xf]
    %v1234 = vrot.slane %v977, 3
    %v1235 = vrot.slane %v978, 3
    %v1236 = vsel %vm356, %v1234, %v1235
    %v1237 = vsel %vm994, %v1236, 0
    %v1240 = vsel %vm463, %v1233, 0
    %1242 = vmatprep.subr.mxu0 0.0
    %1243 = vmatpush1.msra.mxu0 0.0
    %1244 = vmatprep.subr.mxu0 0.0
    %1245 = vmatpush1.msra.mxu0 0.0
    %1246 = vmatprep.subr.mxu0 0.0
    %1247 = vmatpush1.msra.mxu0 0.0
    %1248 = vmatprep.subr.mxu0 0.0
    %1249 = vmatpush1.msra.mxu0 0.0
    %1250 = vmatprep.subr.mxu0 0.0
    %1251 = vmatpush1.msra.mxu0 0.0
    %1252 = vmatprep.subr.mxu0 0.0
    %1253 = vmatpush1.msra.mxu0 0.0
    %1254 = vmatprep.subr.mxu0 0.0
    %1255 = vmatpush1.msra.mxu0 0.0
    %1256 = vmatprep.subr.mxu0 0.0
    %1257 = vmatpush1.msra.mxu0 0.0
    %1258 = vmatprep.subr.mxu0 0.0
    %1259 = vmatpush1.msra.mxu0 0.0
    %1260 = vmatprep.subr.mxu0 0.0
    %1261 = vmatpush1.msra.mxu0 0.0
    %1262 = vmatprep.subr.mxu0 0.0
    %1263 = vmatpush1.msra.mxu0 0.0
    %1264 = vmatprep.subr.mxu0 0.0
    %1265 = vmatpush1.msra.mxu0 %v1240
    %1266 = vmatprep.subr.mxu0 0.0
    %1267 = vmatpush1.msra.mxu0 %v1232
    %1268 = vmatprep.subr.mxu0 0.0
    %1269 = vmatpush1.msra.mxu0 %v1231
    %1270 = vmatprep.subr.mxu0 0.0
    %1271 = vmatpush1.msra.mxu0 %v1230
    %1272 = vmatprep.subr.mxu0 0.0
    %1273 = vmatpush1.msra.mxu0 %v1229
    %1274 = vmatprep.subr.mxu0 0.0
    %1275 = vmatpush2.msra.mxu0 0.0
    %1276 = vmatprep.subr.mxu0 0.0
    %1277 = vmatpush2.msra.mxu0 0.0
    %1278 = vmatprep.subr.mxu0 0.0
    %1279 = vmatpush2.msra.mxu0 0.0
    %1280 = vmatprep.subr.mxu0 0.0
    %1281 = vmatpush2.msra.mxu0 0.0
    %1282 = vmatprep.subr.mxu0 0.0
    %1283 = vmatpush2.msra.mxu0 0.0
    %1284 = vmatprep.subr.mxu0 0.0
    %1285 = vmatpush2.msra.mxu0 0.0
    %1286 = vmatprep.subr.mxu0 0.0
    %1287 = vmatpush2.msra.mxu0 0.0
    %1288 = vmatprep.subr.mxu0 0.0
    %1289 = vmatpush2.msra.mxu0 0.0
    %1290 = vmatprep.subr.mxu0 0.0
    %1291 = vmatpush2.msra.mxu0 0.0
    %1292 = vmatprep.subr.mxu0 0.0
    %1293 = vmatpush2.msra.mxu0 0.0
    %1294 = vmatprep.subr.mxu0 0.0
    %1295 = vmatpush2.msra.mxu0 0.0
    %1296 = vmatprep.subr.mxu0 0.0
    %1297 = vmatpush2.msra.mxu0 0.0
    %1298 = vmatprep.subr.mxu0 0.0
    %1299 = vmatpush2.msra.mxu0 0.0
    %1300 = vmatprep.subr.mxu0 0.0
    %1301 = vmatpush2.msra.mxu0 0.0
    %1302 = vmatprep.subr.mxu0 0.0
    %1303 = vmatpush2.msra.mxu0 0.0
    %1304 = vmatprep.subr.mxu0 0.0
    %1305 = vmatpush2.msra.mxu0 0.0
    %1306 = vmatprep.mubr.f32.mxu0 0.0
    %1307 = vmatmul.mubr.f32.gmra.mxu0 %v1237
    %v1308 = vpop.f32.mrf.mxu0
    %v1309 = vadd.f32 0.0, %v1308
    %v1310 = vpop.f32.mrf.mxu0
    %1311 = vdwg.mxu0
    %v1312 = vadd.f32 %v1228, %v1309
    %v1313 = vld [vmem:[#allocation5 + $0xf0] sm:$0xff]
    %v1314 = vld [vmem:[#allocation5 + $0xf8] sm:$0xff]
    %v1315 = vld [vmem:[#allocation5 + $0x100] sm:$0xff]
    %v1316 = vld [vmem:[#allocation5 + $0x108] sm:$0xff]
    %v1317 = vld [vmem:[#allocation5 + $0x110] sm:$0xf]
    %v1318 = vrot.slane %v977, 4
    %v1319 = vrot.slane %v978, 4
    %v1320 = vsel %vm463, %v1318, %v1319
    %v1321 = vsel %vm994, %v1320, 0
    %v1324 = vsel %vm463, %v1317, 0
    %1326 = vmatprep.subr.mxu0 0.0
    %1327 = vmatpush1.msra.mxu0 0.0
    %1328 = vmatprep.subr.mxu0 0.0
    %1329 = vmatpush1.msra.mxu0 0.0
    %1330 = vmatprep.subr.mxu0 0.0
    %1331 = vmatpush1.msra.mxu0 0.0
    %1332 = vmatprep.subr.mxu0 0.0
    %1333 = vmatpush1.msra.mxu0 0.0
    %1334 = vmatprep.subr.mxu0 0.0
    %1335 = vmatpush1.msra.mxu0 0.0
    %1336 = vmatprep.subr.mxu0 0.0
    %1337 = vmatpush1.msra.mxu0 0.0
    %1338 = vmatprep.subr.mxu0 0.0
    %1339 = vmatpush1.msra.mxu0 0.0
    %1340 = vmatprep.subr.mxu0 0.0
    %1341 = vmatpush1.msra.mxu0 0.0
    %1342 = vmatprep.subr.mxu0 0.0
    %1343 = vmatpush1.msra.mxu0 0.0
    %1344 = vmatprep.subr.mxu0 0.0
    %1345 = vmatpush1.msra.mxu0 0.0
    %1346 = vmatprep.subr.mxu0 0.0
    %1347 = vmatpush1.msra.mxu0 0.0
    %1348 = vmatprep.subr.mxu0 0.0
    %1349 = vmatpush1.msra.mxu0 %v1324
    %1350 = vmatprep.subr.mxu0 0.0
    %1351 = vmatpush1.msra.mxu0 %v1316
    %1352 = vmatprep.subr.mxu0 0.0
    %1353 = vmatpush1.msra.mxu0 %v1315
    %1354 = vmatprep.subr.mxu0 0.0
    %1355 = vmatpush1.msra.mxu0 %v1314
    %1356 = vmatprep.subr.mxu0 0.0
    %1357 = vmatpush1.msra.mxu0 %v1313
    %1358 = vmatprep.subr.mxu0 0.0
    %1359 = vmatpush2.msra.mxu0 0.0
    %1360 = vmatprep.subr.mxu0 0.0
    %1361 = vmatpush2.msra.mxu0 0.0
    %1362 = vmatprep.subr.mxu0 0.0
    %1363 = vmatpush2.msra.mxu0 0.0
    %1364 = vmatprep.subr.mxu0 0.0
    %1365 = vmatpush2.msra.mxu0 0.0
    %1366 = vmatprep.subr.mxu0 0.0
    %1367 = vmatpush2.msra.mxu0 0.0
    %1368 = vmatprep.subr.mxu0 0.0
    %1369 = vmatpush2.msra.mxu0 0.0
    %1370 = vmatprep.subr.mxu0 0.0
    %1371 = vmatpush2.msra.mxu0 0.0
    %1372 = vmatprep.subr.mxu0 0.0
    %1373 = vmatpush2.msra.mxu0 0.0
    %1374 = vmatprep.subr.mxu0 0.0
    %1375 = vmatpush2.msra.mxu0 0.0
    %1376 = vmatprep.subr.mxu0 0.0
    %1377 = vmatpush2.msra.mxu0 0.0
    %1378 = vmatprep.subr.mxu0 0.0
    %1379 = vmatpush2.msra.mxu0 0.0
    %1380 = vmatprep.subr.mxu0 0.0
    %1381 = vmatpush2.msra.mxu0 0.0
    %1382 = vmatprep.subr.mxu0 0.0
    %1383 = vmatpush2.msra.mxu0 0.0
    %1384 = vmatprep.subr.mxu0 0.0
    %1385 = vmatpush2.msra.mxu0 0.0
    %1386 = vmatprep.subr.mxu0 0.0
    %1387 = vmatpush2.msra.mxu0 0.0
    %1388 = vmatprep.subr.mxu0 0.0
    %1389 = vmatpush2.msra.mxu0 0.0
    %1390 = vmatprep.mubr.f32.mxu0 0.0
    %1391 = vmatmul.mubr.f32.gmra.mxu0 %v1321
    %v1392 = vpop.f32.mrf.mxu0
    %v1393 = vadd.f32 0.0, %v1392
    %v1394 = vpop.f32.mrf.mxu0
    %1395 = vdwg.mxu0
    %v1396 = vadd.f32 %v1312, %v1393
    %v1397 = vld [vmem:[#allocation5 + $0x1b0] sm:$0x1]
    %v1398 = vlaneseq
    %v1399 = vshrl.u32 %v1398, 7
    %v1400 = vsub.s32 0, %v1399
    %v1401 = vrot.slane %v1397, %v1400
    %v1402 = vadd.f32 %v1396, %v1401
    %v1403 = vmax.f32 %v1402, 0.0
    %v1404 = vmul.u32 %v582, 6
    %vm1405 = vcmp.eq.s32.totalorder %v585, %v1404
    %v1406 = vsel %vm1405, 1, 0
    %v1407 = vcvt.s32.f32 %v1406
    %v1408 = vadd.s32 %v1404, 1
    %vm1409 = vcmp.eq.s32.totalorder %v585, %v1408
    %v1410 = vsel %vm1409, 1, 0
    %v1411 = vcvt.s32.f32 %v1410
    %vm1412 = vcmask 64512
    %v1414 = vsel %vm1412, %v1407, 0
    %1416 = vmatprep.subr.mxu0 0.0
    %1417 = vmatpush1.msra.mxu0 0.0
    %1418 = vmatprep.subr.mxu0 0.0
    %1419 = vmatpush1.msra.mxu0 0.0
    %1420 = vmatprep.subr.mxu0 0.0
    %1421 = vmatpush1.msra.mxu0 0.0
    %1422 = vmatprep.subr.mxu0 0.0
    %1423 = vmatpush1.msra.mxu0 0.0
    %1424 = vmatprep.subr.mxu0 0.0
    %1425 = vmatpush1.msra.mxu0 0.0
    %1426 = vmatprep.subr.mxu0 0.0
    %1427 = vmatpush1.msra.mxu0 0.0
    %1428 = vmatprep.subr.mxu0 0.0
    %1429 = vmatpush1.msra.mxu0 0.0
    %1430 = vmatprep.subr.mxu0 0.0
    %1431 = vmatpush1.msra.mxu0 0.0
    %1432 = vmatprep.subr.mxu0 0.0
    %1433 = vmatpush1.msra.mxu0 0.0
    %1434 = vmatprep.subr.mxu0 0.0
    %1435 = vmatpush1.msra.mxu0 0.0
    %1436 = vmatprep.subr.mxu0 0.0
    %1437 = vmatpush1.msra.mxu0 0.0
    %1438 = vmatprep.subr.mxu0 0.0
    %1439 = vmatpush1.msra.mxu0 0.0
    %1440 = vmatprep.subr.mxu0 0.0
    %1441 = vmatpush1.msra.mxu0 0.0
    %1442 = vmatprep.subr.mxu0 0.0
    %1443 = vmatpush1.msra.mxu0 0.0
    %1444 = vmatprep.subr.mxu0 0.0
    %1445 = vmatpush1.msra.mxu0 0.0
    %1446 = vmatprep.subr.mxu0 0.0
    %1447 = vmatpush1.msra.mxu0 %v1403
    %1448 = vmatprep.subr.mxu0 0.0
    %1449 = vmatpush2.msra.mxu0 0.0
    %1450 = vmatprep.subr.mxu0 0.0
    %1451 = vmatpush2.msra.mxu0 0.0
    %1452 = vmatprep.subr.mxu0 0.0
    %1453 = vmatpush2.msra.mxu0 0.0
    %1454 = vmatprep.subr.mxu0 0.0
    %1455 = vmatpush2.msra.mxu0 0.0
    %1456 = vmatprep.subr.mxu0 0.0
    %1457 = vmatpush2.msra.mxu0 0.0
    %1458 = vmatprep.subr.mxu0 0.0
    %1459 = vmatpush2.msra.mxu0 0.0
    %1460 = vmatprep.subr.mxu0 0.0
    %1461 = vmatpush2.msra.mxu0 0.0
    %1462 = vmatprep.subr.mxu0 0.0
    %1463 = vmatpush2.msra.mxu0 0.0
    %1464 = vmatprep.subr.mxu0 0.0
    %1465 = vmatpush2.msra.mxu0 0.0
    %1466 = vmatprep.subr.mxu0 0.0
    %1467 = vmatpush2.msra.mxu0 0.0
    %1468 = vmatprep.subr.mxu0 0.0
    %1469 = vmatpush2.msra.mxu0 0.0
    %1470 = vmatprep.subr.mxu0 0.0
    %1471 = vmatpush2.msra.mxu0 0.0
    %1472 = vmatprep.subr.mxu0 0.0
    %1473 = vmatpush2.msra.mxu0 0.0
    %1474 = vmatprep.subr.mxu0 0.0
    %1475 = vmatpush2.msra.mxu0 0.0
    %1476 = vmatprep.subr.mxu0 0.0
    %1477 = vmatpush2.msra.mxu0 0.0
    %1478 = vmatprep.subr.mxu0 0.0
    %1479 = vmatpush2.msra.mxu0 0.0
    %1480 = vmatprep.mubr.f32.mxu0 0.0
    %1481 = vmatmul.mubr.f32.gmra.mxu0 %v1414
    %v1482 = vpop.f32.mrf.mxu0
    %v1483 = vadd.f32 0.0, %v1482
    %v1484 = vpop.f32.mrf.mxu0
    %1485 = vdwg.mxu0
    %v1487 = vsel %vm1412, %v1411, 0
    %1489 = vmatprep.subr.mxu0 0.0
    %1490 = vmatpush1.msra.mxu0 0.0
    %1491 = vmatprep.subr.mxu0 0.0
    %1492 = vmatpush1.msra.mxu0 0.0
    %1493 = vmatprep.subr.mxu0 0.0
    %1494 = vmatpush1.msra.mxu0 0.0
    %1495 = vmatprep.subr.mxu0 0.0
    %1496 = vmatpush1.msra.mxu0 0.0
    %1497 = vmatprep.subr.mxu0 0.0
    %1498 = vmatpush1.msra.mxu0 0.0
    %1499 = vmatprep.subr.mxu0 0.0
    %1500 = vmatpush1.msra.mxu0 0.0
    %1501 = vmatprep.subr.mxu0 0.0
    %1502 = vmatpush1.msra.mxu0 0.0
    %1503 = vmatprep.subr.mxu0 0.0
    %1504 = vmatpush1.msra.mxu0 0.0
    %1505 = vmatprep.subr.mxu0 0.0
    %1506 = vmatpush1.msra.mxu0 0.0
    %1507 = vmatprep.subr.mxu0 0.0
    %1508 = vmatpush1.msra.mxu0 0.0
    %1509 = vmatprep.subr.mxu0 0.0
    %1510 = vmatpush1.msra.mxu0 0.0
    %1511 = vmatprep.subr.mxu0 0.0
    %1512 = vmatpush1.msra.mxu0 0.0
    %1513 = vmatprep.subr.mxu0 0.0
    %1514 = vmatpush1.msra.mxu0 0.0
    %1515 = vmatprep.subr.mxu0 0.0
    %1516 = vmatpush1.msra.mxu0 0.0
    %1517 = vmatprep.subr.mxu0 0.0
    %1518 = vmatpush1.msra.mxu0 0.0
    %1519 = vmatprep.subr.mxu0 0.0
    %1520 = vmatpush1.msra.mxu0 %v1403
    %1521 = vmatprep.subr.mxu0 0.0
    %1522 = vmatpush2.msra.mxu0 0.0
    %1523 = vmatprep.subr.mxu0 0.0
    %1524 = vmatpush2.msra.mxu0 0.0
    %1525 = vmatprep.subr.mxu0 0.0
    %1526 = vmatpush2.msra.mxu0 0.0
    %1527 = vmatprep.subr.mxu0 0.0
    %1528 = vmatpush2.msra.mxu0 0.0
    %1529 = vmatprep.subr.mxu0 0.0
    %1530 = vmatpush2.msra.mxu0 0.0
    %1531 = vmatprep.subr.mxu0 0.0
    %1532 = vmatpush2.msra.mxu0 0.0
    %1533 = vmatprep.subr.mxu0 0.0
    %1534 = vmatpush2.msra.mxu0 0.0
    %1535 = vmatprep.subr.mxu0 0.0
    %1536 = vmatpush2.msra.mxu0 0.0
    %1537 = vmatprep.subr.mxu0 0.0
    %1538 = vmatpush2.msra.mxu0 0.0
    %1539 = vmatprep.subr.mxu0 0.0
    %1540 = vmatpush2.msra.mxu0 0.0
    %1541 = vmatprep.subr.mxu0 0.0
    %1542 = vmatpush2.msra.mxu0 0.0
    %1543 = vmatprep.subr.mxu0 0.0
    %1544 = vmatpush2.msra.mxu0 0.0
    %1545 = vmatprep.subr.mxu0 0.0
    %1546 = vmatpush2.msra.mxu0 0.0
    %1547 = vmatprep.subr.mxu0 0.0
    %1548 = vmatpush2.msra.mxu0 0.0
    %1549 = vmatprep.subr.mxu0 0.0
    %1550 = vmatpush2.msra.mxu0 0.0
    %1551 = vmatprep.subr.mxu0 0.0
    %1552 = vmatpush2.msra.mxu0 0.0
    %1553 = vmatprep.mubr.f32.mxu0 0.0
    %1554 = vmatmul.mubr.f32.gmra.mxu0 %v1487
    %v1555 = vpop.f32.mrf.mxu0
    %v1556 = vadd.f32 0.0, %v1555
    %v1557 = vpop.f32.mrf.mxu0
    %1558 = vdwg.mxu0
    %v1559 = vmax.f32 %v1483, %v1556
    %1561 = vrot.lane.b32.xlu0 %v1559, 112
    %v1562 = vpop.permute.xlu0 %1561
    %v1564 = vmax.f32 %v1559, %v1562
    %v1565 = vmul.f32 %v1564, %v1564
    %vm1566 = vcmask 123904
    %v1567 = vsel %vm1566, %v1565, 0.0
    %1568 = vadd.xlane.f32.xlu0 %v1567
    %v1569 = vpop.xlane.xlu0 %1568
    %v1570 = vrsqrt.pop %v1569
    %v1571 = vmul.f32 %v1564, %v1570
    %v1572 = vld [vmem:[#allocation5 + $0x1b8] sm:$0xff]
    %v1573 = vld [vmem:[#allocation5 + $0x1c0] sm:$0xff]
    %v1574 = vld [vmem:[#allocation5 + $0x1c8] sm:$0x1]
    %v1575 = vlaneseq
    %v1576 = vshrl.u32 %v1575, 7
    %v1577 = vsub.s32 0, %v1576
    %v1578 = vrot.slane %v1574, %v1577
    %v1580 = vsel %vm60, %v1571, 0
    %1582 = vmatprep.subr.mxu0 0.0
    %1583 = vmatpush1.msra.mxu0 0.0
    %1584 = vmatprep.subr.mxu0 0.0
    %1585 = vmatpush1.msra.mxu0 0.0
    %1586 = vmatprep.subr.mxu0 0.0
    %1587 = vmatpush1.msra.mxu0 0.0
    %1588 = vmatprep.subr.mxu0 0.0
    %1589 = vmatpush1.msra.mxu0 0.0
    %1590 = vmatprep.subr.mxu0 0.0
    %1591 = vmatpush1.msra.mxu0 0.0
    %1592 = vmatprep.subr.mxu0 0.0
    %1593 = vmatpush1.msra.mxu0 0.0
    %1594 = vmatprep.subr.mxu0 0.0
    %1595 = vmatpush1.msra.mxu0 0.0
    %1596 = vmatprep.subr.mxu0 0.0
    %1597 = vmatpush1.msra.mxu0 0.0
    %1598 = vmatprep.subr.mxu0 0.0
    %1599 = vmatpush1.msra.mxu0 0.0
    %1600 = vmatprep.subr.mxu0 0.0
    %1601 = vmatpush1.msra.mxu0 0.0
    %1602 = vmatprep.subr.mxu0 0.0
    %1603 = vmatpush1.msra.mxu0 0.0
    %1604 = vmatprep.subr.mxu0 0.0
    %1605 = vmatpush1.msra.mxu0 0.0
    %1606 = vmatprep.subr.mxu0 0.0
    %1607 = vmatpush1.msra.mxu0 0.0
    %1608 = vmatprep.subr.mxu0 0.0
    %1609 = vmatpush1.msra.mxu0 0.0
    %1610 = vmatprep.subr.mxu0 0.0
    %1611 = vmatpush1.msra.mxu0 %v1573
    %1612 = vmatprep.subr.mxu0 0.0
    %1613 = vmatpush1.msra.mxu0 %v1572
    %1614 = vmatprep.subr.mxu0 0.0
    %1615 = vmatpush2.msra.mxu0 0.0
    %1616 = vmatprep.subr.mxu0 0.0
    %1617 = vmatpush2.msra.mxu0 0.0
    %1618 = vmatprep.subr.mxu0 0.0
    %1619 = vmatpush2.msra.mxu0 0.0
    %1620 = vmatprep.subr.mxu0 0.0
    %1621 = vmatpush2.msra.mxu0 0.0
    %1622 = vmatprep.subr.mxu0 0.0
    %1623 = vmatpush2.msra.mxu0 0.0
    %1624 = vmatprep.subr.mxu0 0.0
    %1625 = vmatpush2.msra.mxu0 0.0
    %1626 = vmatprep.subr.mxu0 0.0
    %1627 = vmatpush2.msra.mxu0 0.0
    %1628 = vmatprep.subr.mxu0 0.0
    %1629 = vmatpush2.msra.mxu0 0.0
    %1630 = vmatprep.subr.mxu0 0.0
    %1631 = vmatpush2.msra.mxu0 0.0
    %1632 = vmatprep.subr.mxu0 0.0
    %1633 = vmatpush2.msra.mxu0 0.0
    %1634 = vmatprep.subr.mxu0 0.0
    %1635 = vmatpush2.msra.mxu0 0.0
    %1636 = vmatprep.subr.mxu0 0.0
    %1637 = vmatpush2.msra.mxu0 0.0
    %1638 = vmatprep.subr.mxu0 0.0
    %1639 = vmatpush2.msra.mxu0 0.0
    %1640 = vmatprep.subr.mxu0 0.0
    %1641 = vmatpush2.msra.mxu0 0.0
    %1642 = vmatprep.subr.mxu0 0.0
    %1643 = vmatpush2.msra.mxu0 0.0
    %1644 = vmatprep.subr.mxu0 0.0
    %1645 = vmatpush2.msra.mxu0 0.0
    %1646 = vmatprep.mubr.f32.mxu0 0.0
    %1647 = vmatmul.mubr.f32.gmra.mxu0 %v1580
    %v1648 = vpop.f32.mrf.mxu0
    %v1649 = vadd.f32 %v1578, %v1648
    %v1650 = vpop.f32.mrf.mxu0
    %1651 = vdwg.mxu0
    %vm1652 = vcmask 74752
    %1653 = vst.msk [vmem:[#allocation7] sm:$0x3] %vm1652, %v1649
    // Predicated region
    $region18: #{_lambda_.1} parent=1 // pred_check
      _
    $region19: #{_lambda_.1} parent=1 // pred_check_branch
      %1655 = sbr.rel (0) target = $region21
    $region20: #{_lambda_.1} parent=1 // pred_region
      %s1657 = ssub.s32 32, 32
      %1658 = vsyncadd [#allocation4], %s1657
      %s1660 = sshll.u32 [#allocation7], 4
      %s1661 = int_to_ptr.vmem [resolvable:$true] %s1660
      %1663 = dma.vmem_to_hbm [thread:$0]  %s1661, 32, %s2, [#allocation4]
    $region21: #{_lambda_.1} parent=1 // pred_fallthru
      _
    // Predicated region
    $region22: #{_lambda_.1} parent=1 // pred_check
      _
    $region23: #{_lambda_.1} parent=1 // pred_check_branch
      %1665 = sbr.rel (0) target = $region25
    $region24: #{_lambda_.1} parent=1 // pred_region
      %1666 = dma.done [#allocation4], 32
    $region25: #{_lambda_.1} parent=1 // pred_fallthru
      _
    %1667 = vsyncpa [#allocation3], 1
    %1668 = vsyncpa [#allocation6], 1
    %1669 = vsyncpa [#allocation4], 1

</llo_original>
